<compile_context>
chip_gen: v6e
topology: v6e:2x2x1
jax: 0.10.0
libtpu: 0.0.40
codegen_flags: <defaults>
</compile_context>

<pallas_src>
import jax
import jax.numpy as jnp
import numpy as np
from jax.experimental import pallas as pl
from jax.experimental.pallas import tpu as pltpu


# Tap k = kh*3 + kw of the 3x3 / stride-2 / pad-1 depthwise conv reads
# h1_pad[2*ho + kh, 2*wo + kw]. In terms of the parity planes of the padded h1
# (plane order 0:(even,even) 1:(even,odd) 2:(odd,even) 3:(odd,odd)) that is
# plane[p][ho + ro, wo + co] with (p, ro, co) given below.
_TAPS = (
    (0, 0, 0), (1, 0, 0), (0, 0, 1),
    (2, 0, 0), (3, 0, 0), (2, 0, 1),
    (0, 1, 0), (1, 1, 0), (0, 1, 1),
)

# h1 parity plane q (0:ee 1:eo 2:oe 3:oo, parities of the *unpadded* h1/x)
# -> (padded-plane index, row offset, col offset) it lands in after zero-pad=1.
_H1_DEST = ((3, 0, 0), (2, 0, 1), (1, 1, 0), (0, 1, 1))


def _res_conv_fused_kernel(x_ref, w1_ref, b1_ref, w2_ref, b2_ref, w3_ref,
                           b3_ref, o_ref, hpad_ref):
    # x_ref   : (1, 4, C, Ho, Wo)  parity-split input image (VMEM block)
    # w*_ref  : SMEM scalar tables; BN scale already folded into the weights
    # o_ref   : (1, C, Ho, Wo)     output block (NCHW)
    # hpad_ref: (4, m, Ho+1, Wo+1) zero-padded parity planes of h1 (VMEM)
    C = x_ref.shape[2]
    m = w1_ref.shape[1]
    Ho, Wo = o_ref.shape[2], o_ref.shape[3]

    # ---- stage 1: 1x1 conv (C -> m) + folded BN + ReLU ----------------------
    # Zero the padded planes; the untouched border rows/cols provide the
    # depthwise conv's zero padding.
    hpad_ref[...] = jnp.zeros_like(hpad_ref)
    for q in range(4):
        plane, ro, co = _H1_DEST[q]
        for j in range(m):
            acc = jnp.zeros((Ho, Wo), jnp.float32)
            for i in range(C):
                acc = acc + x_ref[0, q, i] * w1_ref[i, j]       # VPU scalar FMA
            h1 = jnp.maximum(acc + b1_ref[0, j], 0.0)
            hpad_ref[plane, j, ro:ro + Ho, co:co + Wo] = h1

    # ---- stage 2: depthwise 3x3, stride 2, pad 1 + folded BN + ReLU ---------
    h2 = []
    for j in range(m):
        acc = jnp.zeros((Ho, Wo), jnp.float32)
        for k, (plane, ro, co) in enumerate(_TAPS):
            tap = hpad_ref[plane, j, ro:ro + Ho, co:co + Wo]    # unit-stride VMEM slice
            acc = acc + tap * w2_ref[k, j]
        h2.append(jnp.maximum(acc + b2_ref[0, j], 0.0))

    # ---- stage 3: 1x1 conv (m -> C) + folded BN + ReLU ----------------------
    for c in range(C):
        acc = jnp.zeros((Ho, Wo), jnp.float32)
        for j in range(m):
            acc = acc + h2[j] * w3_ref[j, c]
        o_ref[0, c, :, :] = jnp.maximum(acc + b3_ref[0, c], 0.0).astype(o_ref.dtype)


def _fold_bn(bn_params, eps=1e-5):
    gamma, beta, mean, var = bn_params
    scale = gamma / jnp.sqrt(var + eps)
    bias = beta - mean * scale
    return scale, bias


def res_conv_forward(x_nchw, params):
    N, C, H, W = x_nchw.shape
    m = params["w1"].shape[1]
    if H % 2 or W % 2:
        # TODO(synk): odd spatial sizes need a different parity/pad layout.
        raise ValueError("fused ResConv kernel requires even H and W")
    Ho, Wo = H // 2, W // 2

    # Fold BatchNorm (inference stats) into per-channel scale/bias, then fold
    # the scale into the conv weights so the kernel does MAC + bias + ReLU only.
    s1, b1 = _fold_bn(params["bn1"])
    s2, b2 = _fold_bn(params["bn2"])
    s3, b3 = _fold_bn(params["bn3"])
    w1f = (params["w1"] * s1[None, :]).astype(jnp.float32)                # (C, m)
    w2f = (params["w2"].reshape(9, m) * s2[None, :]).astype(jnp.float32)  # (9, m)
    w3f = (params["w3"] * s3[None, :]).astype(jnp.float32)                # (m, C)

    # Parity-split the NCHW input (even/odd rows x cols). Same total bytes as
    # x; turns every stride-2 tap into a unit-stride slice inside the kernel.
    x = x_nchw.astype(jnp.float32)
    x_pp = jnp.stack(
        [x[:, :, 0::2, 0::2], x[:, :, 0::2, 1::2],
         x[:, :, 1::2, 0::2], x[:, :, 1::2, 1::2]],
        axis=1)                                                           # (N,4,C,Ho,Wo)

    smem = pl.BlockSpec(memory_space=pltpu.MemorySpace.SMEM)
    return pl.pallas_call(
        _res_conv_fused_kernel,
        out_shape=jax.ShapeDtypeStruct((N, C, Ho, Wo), jnp.float32),
        grid=(N,),
        in_specs=[
            pl.BlockSpec((1, 4, C, Ho, Wo), lambda n: (n, 0, 0, 0, 0)),
            smem, smem, smem, smem, smem, smem,
        ],
        out_specs=pl.BlockSpec((1, C, Ho, Wo), lambda n: (n, 0, 0, 0)),
        scratch_shapes=[pltpu.VMEM((4, m, Ho + 1, Wo + 1), jnp.float32)],
        compiler_params=pltpu.CompilerParams(
            dimension_semantics=("parallel",)),
    )(x_pp,
      w1f, b1.reshape(1, m).astype(jnp.float32),
      w2f, b2.reshape(1, m).astype(jnp.float32),
      w3f, b3.reshape(1, C).astype(jnp.float32))


# ----------------------------------------------------------------------------
# Deterministic parameter init (synthetic; shapes follow the module __init__)
# ----------------------------------------------------------------------------
def init_params(key, in_channels, multiple=0.5):
    m = int(in_channels * multiple)
    ks = jax.random.split(key, 6)

    def bn_init(k, c):
        kg, kb, km, kv = jax.random.split(k, 4)
        gamma = jax.random.uniform(kg, (c,), minval=0.5, maxval=1.5)
        beta = 0.1 * jax.random.normal(kb, (c,))
        mean = 0.1 * jax.random.normal(km, (c,))
        var = jax.random.uniform(kv, (c,), minval=0.5, maxval=1.5)
        return (gamma, beta, mean, var)

    return dict(
        w1=0.5 * jax.random.normal(ks[0], (in_channels, m)),   # 1x1, (Cin, Cout)
        w2=0.3 * jax.random.normal(ks[1], (9, 1, m)),          # depthwise (kh*kw, 1, C)
        w3=0.5 * jax.random.normal(ks[2], (m, in_channels)),   # 1x1, (Cin, Cout)
        bn1=bn_init(ks[3], m),
        bn2=bn_init(ks[4], m),
        bn3=bn_init(ks[5], in_channels),
    )


# ----------------------------------------------------------------------------
# Pure-JAX reference (correctness check only)
# ----------------------------------------------------------------------------
def reference_forward(x_nchw, params):
    x = jnp.transpose(x_nchw, (0, 2, 3, 1))
    C = x.shape[-1]
    m = params["w1"].shape[1]

    def bn_relu(y, bnp):
        g, b, mu, v = bnp
        return jnp.maximum(g * (y - mu) / jnp.sqrt(v + 1e-5) + b, 0.0)

    dn = ("NHWC", "HWIO", "NHWC")
    y = jax.lax.conv_general_dilated(
        x, params["w1"].reshape(1, 1, C, m), (1, 1), "VALID",
        dimension_numbers=dn, precision="highest")
    y = bn_relu(y, params["bn1"])
    y = jax.lax.conv_general_dilated(
        y, params["w2"].reshape(3, 3, 1, m), (2, 2), ((1, 1), (1, 1)),
        dimension_numbers=dn, feature_group_count=m, precision="highest")
    y = bn_relu(y, params["bn2"])
    y = jax.lax.conv_general_dilated(
        y, params["w3"].reshape(1, 1, m, C), (1, 1), "VALID",
        dimension_numbers=dn, precision="highest")
    y = bn_relu(y, params["bn3"])
    return jnp.transpose(y, (0, 3, 1, 2))


if __name__ == "__main__":
    key = jax.random.PRNGKey(0)
    kx, kp = jax.random.split(key)
    N, C, H, W = 2, 4, 16, 16                      # in_channels=4, multiple=0.5 -> m=2
    x = jax.random.normal(kx, (N, C, H, W), dtype=jnp.float32)
    params = init_params(kp, C, multiple=0.5)

    out = jax.jit(res_conv_forward)(x, params)
    out = jax.block_until_ready(out)
    assert out.shape == (N, C, H // 2, W // 2)

    ref = reference_forward(x, params)
    np.testing.assert_allclose(np.asarray(out), np.asarray(ref), rtol=2e-2, atol=2e-2)
    print("KERNEL_OK")
</pallas_src>

<mosaic_0001>
module attributes {stable_mosaic.version = 11 : i64} {
  func.func @_res_conv_fused_kernel(%arg0: i32, %arg1: memref<1x4x4x8x8xf32, #tpu.memory_space<vmem>>, %arg2: memref<4x2xf32, #tpu.memory_space<smem>>, %arg3: memref<1x2xf32, #tpu.memory_space<smem>>, %arg4: memref<9x2xf32, #tpu.memory_space<smem>>, %arg5: memref<1x2xf32, #tpu.memory_space<smem>>, %arg6: memref<2x4xf32, #tpu.memory_space<smem>>, %arg7: memref<1x4xf32, #tpu.memory_space<smem>>, %arg8: memref<1x4x8x8xf32, #tpu.memory_space<vmem>>, %arg9: memref<4x2x9x9xf32, #tpu.memory_space<vmem>>) attributes {dimension_semantics = [#tpu.dimension_semantics<parallel>], iteration_bounds = array<i64: 2>, scalar_prefetch = 0 : i64, scratch_operands = 1 : i64, tpu.core_type = #tpu.core_type<tc>, window_params = [{transform_indices = @transform_0, window_bounds = array<i64: 1, 4, 4, 8, 8>}, {transform_indices = @transform_1, window_bounds = array<i64: 4, 2>}, {transform_indices = @transform_2, window_bounds = array<i64: 1, 2>}, {transform_indices = @transform_3, window_bounds = array<i64: 9, 2>}, {transform_indices = @transform_4, window_bounds = array<i64: 1, 2>}, {transform_indices = @transform_5, window_bounds = array<i64: 2, 4>}, {transform_indices = @transform_6, window_bounds = array<i64: 1, 4>}, {transform_indices = @transform_7, window_bounds = array<i64: 1, 4, 8, 8>}]} {
    %cst = arith.constant 0.000000e+00 : f32
    %0 = vector.broadcast %cst : f32 to vector<4x2x9x9xf32>
    %c0 = arith.constant 0 : index
    %c0_0 = arith.constant 0 : index
    %c0_1 = arith.constant 0 : index
    %c0_2 = arith.constant 0 : index
    %1 = vector.load %arg9[%c0, %c0_0, %c0_1, %c0_2] : memref<4x2x9x9xf32, #tpu.memory_space<vmem>>, vector<4x2x9x9xf32>
    tpu.vector_store %arg9[%c0, %c0_0, %c0_1, %c0_2], %0 {strides = array<i32>} : memref<4x2x9x9xf32, #tpu.memory_space<vmem>>, vector<4x2x9x9xf32>,
    %cst_3 = arith.constant 0.000000e+00 : f32
    %2 = vector.broadcast %cst_3 : f32 to vector<8x8xf32>
    %c0_4 = arith.constant 0 : index
    %c0_5 = arith.constant 0 : index
    %c0_6 = arith.constant 0 : index
    %c0_7 = arith.constant 0 : index
    %c0_8 = arith.constant 0 : index
    %3 = vector.load %arg1[%c0_4, %c0_5, %c0_6, %c0_7, %c0_8] : memref<1x4x4x8x8xf32, #tpu.memory_space<vmem>>, vector<1x1x1x8x8xf32>
    %4 = vector.shape_cast %3 : vector<1x1x1x8x8xf32> to vector<8x8xf32>
    %c0_9 = arith.constant 0 : index
    %c0_10 = arith.constant 0 : index
    %5 = memref.load %arg2[%c0_9, %c0_10] : memref<4x2xf32, #tpu.memory_space<smem>>
    %6 = vector.broadcast %5 : f32 to vector<8x8xf32>
    %7 = arith.mulf %4, %6 : vector<8x8xf32>
    %8 = arith.addf %2, %7 : vector<8x8xf32>
    %c0_11 = arith.constant 0 : index
    %c0_12 = arith.constant 0 : index
    %c1 = arith.constant 1 : index
    %c0_13 = arith.constant 0 : index
    %c0_14 = arith.constant 0 : index
    %9 = vector.load %arg1[%c0_11, %c0_12, %c1, %c0_13, %c0_14] : memref<1x4x4x8x8xf32, #tpu.memory_space<vmem>>, vector<1x1x1x8x8xf32>
    %10 = vector.shape_cast %9 : vector<1x1x1x8x8xf32> to vector<8x8xf32>
    %c1_15 = arith.constant 1 : index
    %c0_16 = arith.constant 0 : index
    %11 = memref.load %arg2[%c1_15, %c0_16] : memref<4x2xf32, #tpu.memory_space<smem>>
    %12 = vector.broadcast %11 : f32 to vector<8x8xf32>
    %13 = arith.mulf %10, %12 : vector<8x8xf32>
    %14 = arith.addf %8, %13 : vector<8x8xf32>
    %c0_17 = arith.constant 0 : index
    %c0_18 = arith.constant 0 : index
    %c2 = arith.constant 2 : index
    %c0_19 = arith.constant 0 : index
    %c0_20 = arith.constant 0 : index
    %15 = vector.load %arg1[%c0_17, %c0_18, %c2, %c0_19, %c0_20] : memref<1x4x4x8x8xf32, #tpu.memory_space<vmem>>, vector<1x1x1x8x8xf32>
    %16 = vector.shape_cast %15 : vector<1x1x1x8x8xf32> to vector<8x8xf32>
    %c2_21 = arith.constant 2 : index
    %c0_22 = arith.constant 0 : index
    %17 = memref.load %arg2[%c2_21, %c0_22] : memref<4x2xf32, #tpu.memory_space<smem>>
    %18 = vector.broadcast %17 : f32 to vector<8x8xf32>
    %19 = arith.mulf %16, %18 : vector<8x8xf32>
    %20 = arith.addf %14, %19 : vector<8x8xf32>
    %c0_23 = arith.constant 0 : index
    %c0_24 = arith.constant 0 : index
    %c3 = arith.constant 3 : index
    %c0_25 = arith.constant 0 : index
    %c0_26 = arith.constant 0 : index
    %21 = vector.load %arg1[%c0_23, %c0_24, %c3, %c0_25, %c0_26] : memref<1x4x4x8x8xf32, #tpu.memory_space<vmem>>, vector<1x1x1x8x8xf32>
    %22 = vector.shape_cast %21 : vector<1x1x1x8x8xf32> to vector<8x8xf32>
    %c3_27 = arith.constant 3 : index
    %c0_28 = arith.constant 0 : index
    %23 = memref.load %arg2[%c3_27, %c0_28] : memref<4x2xf32, #tpu.memory_space<smem>>
    %24 = vector.broadcast %23 : f32 to vector<8x8xf32>
    %25 = arith.mulf %22, %24 : vector<8x8xf32>
    %26 = arith.addf %20, %25 : vector<8x8xf32>
    %c0_29 = arith.constant 0 : index
    %c0_30 = arith.constant 0 : index
    %27 = memref.load %arg3[%c0_29, %c0_30] : memref<1x2xf32, #tpu.memory_space<smem>>
    %28 = vector.broadcast %27 : f32 to vector<8x8xf32>
    %29 = arith.addf %26, %28 : vector<8x8xf32>
    %cst_31 = arith.constant 0.000000e+00 : f32
    %30 = vector.broadcast %cst_31 : f32 to vector<8x8xf32>
    %31 = arith.maximumf %29, %30 : vector<8x8xf32>
    %c3_32 = arith.constant 3 : index
    %c0_33 = arith.constant 0 : index
    %c0_34 = arith.constant 0 : index
    %c0_35 = arith.constant 0 : index
    %32 = vector.load %arg9[%c3_32, %c0_33, %c0_34, %c0_35] : memref<4x2x9x9xf32, #tpu.memory_space<vmem>>, vector<1x1x8x8xf32>
    %33 = vector.shape_cast %32 : vector<1x1x8x8xf32> to vector<8x8xf32>
    %34 = vector.shape_cast %31 : vector<8x8xf32> to vector<1x1x8x8xf32>
    tpu.vector_store %arg9[%c3_32, %c0_33, %c0_34, %c0_35], %34 {strides = array<i32>} : memref<4x2x9x9xf32, #tpu.memory_space<vmem>>, vector<1x1x8x8xf32>,
    %cst_36 = arith.constant 0.000000e+00 : f32
    %35 = vector.broadcast %cst_36 : f32 to vector<8x8xf32>
    %c0_37 = arith.constant 0 : index
    %c0_38 = arith.constant 0 : index
    %c0_39 = arith.constant 0 : index
    %c0_40 = arith.constant 0 : index
    %c0_41 = arith.constant 0 : index
    %36 = vector.load %arg1[%c0_37, %c0_38, %c0_39, %c0_40, %c0_41] : memref<1x4x4x8x8xf32, #tpu.memory_space<vmem>>, vector<1x1x1x8x8xf32>
    %37 = vector.shape_cast %36 : vector<1x1x1x8x8xf32> to vector<8x8xf32>
    %c0_42 = arith.constant 0 : index
    %c1_43 = arith.constant 1 : index
    %38 = memref.load %arg2[%c0_42, %c1_43] : memref<4x2xf32, #tpu.memory_space<smem>>
    %39 = vector.broadcast %38 : f32 to vector<8x8xf32>
    %40 = arith.mulf %37, %39 : vector<8x8xf32>
    %41 = arith.addf %35, %40 : vector<8x8xf32>
    %c0_44 = arith.constant 0 : index
    %c0_45 = arith.constant 0 : index
    %c1_46 = arith.constant 1 : index
    %c0_47 = arith.constant 0 : index
    %c0_48 = arith.constant 0 : index
    %42 = vector.load %arg1[%c0_44, %c0_45, %c1_46, %c0_47, %c0_48] : memref<1x4x4x8x8xf32, #tpu.memory_space<vmem>>, vector<1x1x1x8x8xf32>
    %43 = vector.shape_cast %42 : vector<1x1x1x8x8xf32> to vector<8x8xf32>
    %c1_49 = arith.constant 1 : index
    %c1_50 = arith.constant 1 : index
    %44 = memref.load %arg2[%c1_49, %c1_50] : memref<4x2xf32, #tpu.memory_space<smem>>
    %45 = vector.broadcast %44 : f32 to vector<8x8xf32>
    %46 = arith.mulf %43, %45 : vector<8x8xf32>
    %47 = arith.addf %41, %46 : vector<8x8xf32>
    %c0_51 = arith.constant 0 : index
    %c0_52 = arith.constant 0 : index
    %c2_53 = arith.constant 2 : index
    %c0_54 = arith.constant 0 : index
    %c0_55 = arith.constant 0 : index
    %48 = vector.load %arg1[%c0_51, %c0_52, %c2_53, %c0_54, %c0_55] : memref<1x4x4x8x8xf32, #tpu.memory_space<vmem>>, vector<1x1x1x8x8xf32>
    %49 = vector.shape_cast %48 : vector<1x1x1x8x8xf32> to vector<8x8xf32>
    %c2_56 = arith.constant 2 : index
    %c1_57 = arith.constant 1 : index
    %50 = memref.load %arg2[%c2_56, %c1_57] : memref<4x2xf32, #tpu.memory_space<smem>>
    %51 = vector.broadcast %50 : f32 to vector<8x8xf32>
    %52 = arith.mulf %49, %51 : vector<8x8xf32>
    %53 = arith.addf %47, %52 : vector<8x8xf32>
    %c0_58 = arith.constant 0 : index
    %c0_59 = arith.constant 0 : index
    %c3_60 = arith.constant 3 : index
    %c0_61 = arith.constant 0 : index
    %c0_62 = arith.constant 0 : index
    %54 = vector.load %arg1[%c0_58, %c0_59, %c3_60, %c0_61, %c0_62] : memref<1x4x4x8x8xf32, #tpu.memory_space<vmem>>, vector<1x1x1x8x8xf32>
    %55 = vector.shape_cast %54 : vector<1x1x1x8x8xf32> to vector<8x8xf32>
    %c3_63 = arith.constant 3 : index
    %c1_64 = arith.constant 1 : index
    %56 = memref.load %arg2[%c3_63, %c1_64] : memref<4x2xf32, #tpu.memory_space<smem>>
    %57 = vector.broadcast %56 : f32 to vector<8x8xf32>
    %58 = arith.mulf %55, %57 : vector<8x8xf32>
    %59 = arith.addf %53, %58 : vector<8x8xf32>
    %c0_65 = arith.constant 0 : index
    %c1_66 = arith.constant 1 : index
    %60 = memref.load %arg3[%c0_65, %c1_66] : memref<1x2xf32, #tpu.memory_space<smem>>
    %61 = vector.broadcast %60 : f32 to vector<8x8xf32>
    %62 = arith.addf %59, %61 : vector<8x8xf32>
    %cst_67 = arith.constant 0.000000e+00 : f32
    %63 = vector.broadcast %cst_67 : f32 to vector<8x8xf32>
    %64 = arith.maximumf %62, %63 : vector<8x8xf32>
    %c3_68 = arith.constant 3 : index
    %c1_69 = arith.constant 1 : index
    %c0_70 = arith.constant 0 : index
    %c0_71 = arith.constant 0 : index
    %65 = vector.load %arg9[%c3_68, %c1_69, %c0_70, %c0_71] : memref<4x2x9x9xf32, #tpu.memory_space<vmem>>, vector<1x1x8x8xf32>
    %66 = vector.shape_cast %65 : vector<1x1x8x8xf32> to vector<8x8xf32>
    %67 = vector.shape_cast %64 : vector<8x8xf32> to vector<1x1x8x8xf32>
    tpu.vector_store %arg9[%c3_68, %c1_69, %c0_70, %c0_71], %67 {strides = array<i32>} : memref<4x2x9x9xf32, #tpu.memory_space<vmem>>, vector<1x1x8x8xf32>,
    %cst_72 = arith.constant 0.000000e+00 : f32
    %68 = vector.broadcast %cst_72 : f32 to vector<8x8xf32>
    %c0_73 = arith.constant 0 : index
    %c1_74 = arith.constant 1 : index
    %c0_75 = arith.constant 0 : index
    %c0_76 = arith.constant 0 : index
    %c0_77 = arith.constant 0 : index
    %69 = vector.load %arg1[%c0_73, %c1_74, %c0_75, %c0_76, %c0_77] : memref<1x4x4x8x8xf32, #tpu.memory_space<vmem>>, vector<1x1x1x8x8xf32>
    %70 = vector.shape_cast %69 : vector<1x1x1x8x8xf32> to vector<8x8xf32>
    %c0_78 = arith.constant 0 : index
    %c0_79 = arith.constant 0 : index
    %71 = memref.load %arg2[%c0_78, %c0_79] : memref<4x2xf32, #tpu.memory_space<smem>>
    %72 = vector.broadcast %71 : f32 to vector<8x8xf32>
    %73 = arith.mulf %70, %72 : vector<8x8xf32>
    %74 = arith.addf %68, %73 : vector<8x8xf32>
    %c0_80 = arith.constant 0 : index
    %c1_81 = arith.constant 1 : index
    %c1_82 = arith.constant 1 : index
    %c0_83 = arith.constant 0 : index
    %c0_84 = arith.constant 0 : index
    %75 = vector.load %arg1[%c0_80, %c1_81, %c1_82, %c0_83, %c0_84] : memref<1x4x4x8x8xf32, #tpu.memory_space<vmem>>, vector<1x1x1x8x8xf32>
    %76 = vector.shape_cast %75 : vector<1x1x1x8x8xf32> to vector<8x8xf32>
    %c1_85 = arith.constant 1 : index
    %c0_86 = arith.constant 0 : index
    %77 = memref.load %arg2[%c1_85, %c0_86] : memref<4x2xf32, #tpu.memory_space<smem>>
    %78 = vector.broadcast %77 : f32 to vector<8x8xf32>
    %79 = arith.mulf %76, %78 : vector<8x8xf32>
    %80 = arith.addf %74, %79 : vector<8x8xf32>
    %c0_87 = arith.constant 0 : index
    %c1_88 = arith.constant 1 : index
    %c2_89 = arith.constant 2 : index
    %c0_90 = arith.constant 0 : index
    %c0_91 = arith.constant 0 : index
    %81 = vector.load %arg1[%c0_87, %c1_88, %c2_89, %c0_90, %c0_91] : memref<1x4x4x8x8xf32, #tpu.memory_space<vmem>>, vector<1x1x1x8x8xf32>
    %82 = vector.shape_cast %81 : vector<1x1x1x8x8xf32> to vector<8x8xf32>
    %c2_92 = arith.constant 2 : index
    %c0_93 = arith.constant 0 : index
    %83 = memref.load %arg2[%c2_92, %c0_93] : memref<4x2xf32, #tpu.memory_space<smem>>
    %84 = vector.broadcast %83 : f32 to vector<8x8xf32>
    %85 = arith.mulf %82, %84 : vector<8x8xf32>
    %86 = arith.addf %80, %85 : vector<8x8xf32>
    %c0_94 = arith.constant 0 : index
    %c1_95 = arith.constant 1 : index
    %c3_96 = arith.constant 3 : index
    %c0_97 = arith.constant 0 : index
    %c0_98 = arith.constant 0 : index
    %87 = vector.load %arg1[%c0_94, %c1_95, %c3_96, %c0_97, %c0_98] : memref<1x4x4x8x8xf32, #tpu.memory_space<vmem>>, vector<1x1x1x8x8xf32>
    %88 = vector.shape_cast %87 : vector<1x1x1x8x8xf32> to vector<8x8xf32>
    %c3_99 = arith.constant 3 : index
    %c0_100 = arith.constant 0 : index
    %89 = memref.load %arg2[%c3_99, %c0_100] : memref<4x2xf32, #tpu.memory_space<smem>>
    %90 = vector.broadcast %89 : f32 to vector<8x8xf32>
    %91 = arith.mulf %88, %90 : vector<8x8xf32>
    %92 = arith.addf %86, %91 : vector<8x8xf32>
    %c0_101 = arith.constant 0 : index
    %c0_102 = arith.constant 0 : index
    %93 = memref.load %arg3[%c0_101, %c0_102] : memref<1x2xf32, #tpu.memory_space<smem>>
    %94 = vector.broadcast %93 : f32 to vector<8x8xf32>
    %95 = arith.addf %92, %94 : vector<8x8xf32>
    %cst_103 = arith.constant 0.000000e+00 : f32
    %96 = vector.broadcast %cst_103 : f32 to vector<8x8xf32>
    %97 = arith.maximumf %95, %96 : vector<8x8xf32>
    %c2_104 = arith.constant 2 : index
    %c0_105 = arith.constant 0 : index
    %c0_106 = arith.constant 0 : index
    %c1_107 = arith.constant 1 : index
    %98 = vector.load %arg9[%c2_104, %c0_105, %c0_106, %c1_107] : memref<4x2x9x9xf32, #tpu.memory_space<vmem>>, vector<1x1x8x8xf32>
    %99 = vector.shape_cast %98 : vector<1x1x8x8xf32> to vector<8x8xf32>
    %100 = vector.shape_cast %97 : vector<8x8xf32> to vector<1x1x8x8xf32>
    tpu.vector_store %arg9[%c2_104, %c0_105, %c0_106, %c1_107], %100 {strides = array<i32>} : memref<4x2x9x9xf32, #tpu.memory_space<vmem>>, vector<1x1x8x8xf32>,
    %cst_108 = arith.constant 0.000000e+00 : f32
    %101 = vector.broadcast %cst_108 : f32 to vector<8x8xf32>
    %c0_109 = arith.constant 0 : index
    %c1_110 = arith.constant 1 : index
    %c0_111 = arith.constant 0 : index
    %c0_112 = arith.constant 0 : index
    %c0_113 = arith.constant 0 : index
    %102 = vector.load %arg1[%c0_109, %c1_110, %c0_111, %c0_112, %c0_113] : memref<1x4x4x8x8xf32, #tpu.memory_space<vmem>>, vector<1x1x1x8x8xf32>
    %103 = vector.shape_cast %102 : vector<1x1x1x8x8xf32> to vector<8x8xf32>
    %c0_114 = arith.constant 0 : index
    %c1_115 = arith.constant 1 : index
    %104 = memref.load %arg2[%c0_114, %c1_115] : memref<4x2xf32, #tpu.memory_space<smem>>
    %105 = vector.broadcast %104 : f32 to vector<8x8xf32>
    %106 = arith.mulf %103, %105 : vector<8x8xf32>
    %107 = arith.addf %101, %106 : vector<8x8xf32>
    %c0_116 = arith.constant 0 : index
    %c1_117 = arith.constant 1 : index
    %c1_118 = arith.constant 1 : index
    %c0_119 = arith.constant 0 : index
    %c0_120 = arith.constant 0 : index
    %108 = vector.load %arg1[%c0_116, %c1_117, %c1_118, %c0_119, %c0_120] : memref<1x4x4x8x8xf32, #tpu.memory_space<vmem>>, vector<1x1x1x8x8xf32>
    %109 = vector.shape_cast %108 : vector<1x1x1x8x8xf32> to vector<8x8xf32>
    %c1_121 = arith.constant 1 : index
    %c1_122 = arith.constant 1 : index
    %110 = memref.load %arg2[%c1_121, %c1_122] : memref<4x2xf32, #tpu.memory_space<smem>>
    %111 = vector.broadcast %110 : f32 to vector<8x8xf32>
    %112 = arith.mulf %109, %111 : vector<8x8xf32>
    %113 = arith.addf %107, %112 : vector<8x8xf32>
    %c0_123 = arith.constant 0 : index
    %c1_124 = arith.constant 1 : index
    %c2_125 = arith.constant 2 : index
    %c0_126 = arith.constant 0 : index
    %c0_127 = arith.constant 0 : index
    %114 = vector.load %arg1[%c0_123, %c1_124, %c2_125, %c0_126, %c0_127] : memref<1x4x4x8x8xf32, #tpu.memory_space<vmem>>, vector<1x1x1x8x8xf32>
    %115 = vector.shape_cast %114 : vector<1x1x1x8x8xf32> to vector<8x8xf32>
    %c2_128 = arith.constant 2 : index
    %c1_129 = arith.constant 1 : index
    %116 = memref.load %arg2[%c2_128, %c1_129] : memref<4x2xf32, #tpu.memory_space<smem>>
    %117 = vector.broadcast %116 : f32 to vector<8x8xf32>
    %118 = arith.mulf %115, %117 : vector<8x8xf32>
    %119 = arith.addf %113, %118 : vector<8x8xf32>
    %c0_130 = arith.constant 0 : index
    %c1_131 = arith.constant 1 : index
    %c3_132 = arith.constant 3 : index
    %c0_133 = arith.constant 0 : index
    %c0_134 = arith.constant 0 : index
    %120 = vector.load %arg1[%c0_130, %c1_131, %c3_132, %c0_133, %c0_134] : memref<1x4x4x8x8xf32, #tpu.memory_space<vmem>>, vector<1x1x1x8x8xf32>
    %121 = vector.shape_cast %120 : vector<1x1x1x8x8xf32> to vector<8x8xf32>
    %c3_135 = arith.constant 3 : index
    %c1_136 = arith.constant 1 : index
    %122 = memref.load %arg2[%c3_135, %c1_136] : memref<4x2xf32, #tpu.memory_space<smem>>
    %123 = vector.broadcast %122 : f32 to vector<8x8xf32>
    %124 = arith.mulf %121, %123 : vector<8x8xf32>
    %125 = arith.addf %119, %124 : vector<8x8xf32>
    %c0_137 = arith.constant 0 : index
    %c1_138 = arith.constant 1 : index
    %126 = memref.load %arg3[%c0_137, %c1_138] : memref<1x2xf32, #tpu.memory_space<smem>>
    %127 = vector.broadcast %126 : f32 to vector<8x8xf32>
    %128 = arith.addf %125, %127 : vector<8x8xf32>
    %cst_139 = arith.constant 0.000000e+00 : f32
    %129 = vector.broadcast %cst_139 : f32 to vector<8x8xf32>
    %130 = arith.maximumf %128, %129 : vector<8x8xf32>
    %c2_140 = arith.constant 2 : index
    %c1_141 = arith.constant 1 : index
    %c0_142 = arith.constant 0 : index
    %c1_143 = arith.constant 1 : index
    %131 = vector.load %arg9[%c2_140, %c1_141, %c0_142, %c1_143] : memref<4x2x9x9xf32, #tpu.memory_space<vmem>>, vector<1x1x8x8xf32>
    %132 = vector.shape_cast %131 : vector<1x1x8x8xf32> to vector<8x8xf32>
    %133 = vector.shape_cast %130 : vector<8x8xf32> to vector<1x1x8x8xf32>
    tpu.vector_store %arg9[%c2_140, %c1_141, %c0_142, %c1_143], %133 {strides = array<i32>} : memref<4x2x9x9xf32, #tpu.memory_space<vmem>>, vector<1x1x8x8xf32>,
    %cst_144 = arith.constant 0.000000e+00 : f32
    %134 = vector.broadcast %cst_144 : f32 to vector<8x8xf32>
    %c0_145 = arith.constant 0 : index
    %c2_146 = arith.constant 2 : index
    %c0_147 = arith.constant 0 : index
    %c0_148 = arith.constant 0 : index
    %c0_149 = arith.constant 0 : index
    %135 = vector.load %arg1[%c0_145, %c2_146, %c0_147, %c0_148, %c0_149] : memref<1x4x4x8x8xf32, #tpu.memory_space<vmem>>, vector<1x1x1x8x8xf32>
    %136 = vector.shape_cast %135 : vector<1x1x1x8x8xf32> to vector<8x8xf32>
    %c0_150 = arith.constant 0 : index
    %c0_151 = arith.constant 0 : index
    %137 = memref.load %arg2[%c0_150, %c0_151] : memref<4x2xf32, #tpu.memory_space<smem>>
    %138 = vector.broadcast %137 : f32 to vector<8x8xf32>
    %139 = arith.mulf %136, %138 : vector<8x8xf32>
    %140 = arith.addf %134, %139 : vector<8x8xf32>
    %c0_152 = arith.constant 0 : index
    %c2_153 = arith.constant 2 : index
    %c1_154 = arith.constant 1 : index
    %c0_155 = arith.constant 0 : index
    %c0_156 = arith.constant 0 : index
    %141 = vector.load %arg1[%c0_152, %c2_153, %c1_154, %c0_155, %c0_156] : memref<1x4x4x8x8xf32, #tpu.memory_space<vmem>>, vector<1x1x1x8x8xf32>
    %142 = vector.shape_cast %141 : vector<1x1x1x8x8xf32> to vector<8x8xf32>
    %c1_157 = arith.constant 1 : index
    %c0_158 = arith.constant 0 : index
    %143 = memref.load %arg2[%c1_157, %c0_158] : memref<4x2xf32, #tpu.memory_space<smem>>
    %144 = vector.broadcast %143 : f32 to vector<8x8xf32>
    %145 = arith.mulf %142, %144 : vector<8x8xf32>
    %146 = arith.addf %140, %145 : vector<8x8xf32>
    %c0_159 = arith.constant 0 : index
    %c2_160 = arith.constant 2 : index
    %c2_161 = arith.constant 2 : index
    %c0_162 = arith.constant 0 : index
    %c0_163 = arith.constant 0 : index
    %147 = vector.load %arg1[%c0_159, %c2_160, %c2_161, %c0_162, %c0_163] : memref<1x4x4x8x8xf32, #tpu.memory_space<vmem>>, vector<1x1x1x8x8xf32>
    %148 = vector.shape_cast %147 : vector<1x1x1x8x8xf32> to vector<8x8xf32>
    %c2_164 = arith.constant 2 : index
    %c0_165 = arith.constant 0 : index
    %149 = memref.load %arg2[%c2_164, %c0_165] : memref<4x2xf32, #tpu.memory_space<smem>>
    %150 = vector.broadcast %149 : f32 to vector<8x8xf32>
    %151 = arith.mulf %148, %150 : vector<8x8xf32>
    %152 = arith.addf %146, %151 : vector<8x8xf32>
    %c0_166 = arith.constant 0 : index
    %c2_167 = arith.constant 2 : index
    %c3_168 = arith.constant 3 : index
    %c0_169 = arith.constant 0 : index
    %c0_170 = arith.constant 0 : index
    %153 = vector.load %arg1[%c0_166, %c2_167, %c3_168, %c0_169, %c0_170] : memref<1x4x4x8x8xf32, #tpu.memory_space<vmem>>, vector<1x1x1x8x8xf32>
    %154 = vector.shape_cast %153 : vector<1x1x1x8x8xf32> to vector<8x8xf32>
    %c3_171 = arith.constant 3 : index
    %c0_172 = arith.constant 0 : index
    %155 = memref.load %arg2[%c3_171, %c0_172] : memref<4x2xf32, #tpu.memory_space<smem>>
    %156 = vector.broadcast %155 : f32 to vector<8x8xf32>
    %157 = arith.mulf %154, %156 : vector<8x8xf32>
    %158 = arith.addf %152, %157 : vector<8x8xf32>
    %c0_173 = arith.constant 0 : index
    %c0_174 = arith.constant 0 : index
    %159 = memref.load %arg3[%c0_173, %c0_174] : memref<1x2xf32, #tpu.memory_space<smem>>
    %160 = vector.broadcast %159 : f32 to vector<8x8xf32>
    %161 = arith.addf %158, %160 : vector<8x8xf32>
    %cst_175 = arith.constant 0.000000e+00 : f32
    %162 = vector.broadcast %cst_175 : f32 to vector<8x8xf32>
    %163 = arith.maximumf %161, %162 : vector<8x8xf32>
    %c1_176 = arith.constant 1 : index
    %c0_177 = arith.constant 0 : index
    %c1_178 = arith.constant 1 : index
    %c0_179 = arith.constant 0 : index
    %164 = vector.load %arg9[%c1_176, %c0_177, %c1_178, %c0_179] : memref<4x2x9x9xf32, #tpu.memory_space<vmem>>, vector<1x1x8x8xf32>
    %165 = vector.shape_cast %164 : vector<1x1x8x8xf32> to vector<8x8xf32>
    %166 = vector.shape_cast %163 : vector<8x8xf32> to vector<1x1x8x8xf32>
    tpu.vector_store %arg9[%c1_176, %c0_177, %c1_178, %c0_179], %166 {strides = array<i32>} : memref<4x2x9x9xf32, #tpu.memory_space<vmem>>, vector<1x1x8x8xf32>,
    %cst_180 = arith.constant 0.000000e+00 : f32
    %167 = vector.broadcast %cst_180 : f32 to vector<8x8xf32>
    %c0_181 = arith.constant 0 : index
    %c2_182 = arith.constant 2 : index
    %c0_183 = arith.constant 0 : index
    %c0_184 = arith.constant 0 : index
    %c0_185 = arith.constant 0 : index
    %168 = vector.load %arg1[%c0_181, %c2_182, %c0_183, %c0_184, %c0_185] : memref<1x4x4x8x8xf32, #tpu.memory_space<vmem>>, vector<1x1x1x8x8xf32>
    %169 = vector.shape_cast %168 : vector<1x1x1x8x8xf32> to vector<8x8xf32>
    %c0_186 = arith.constant 0 : index
    %c1_187 = arith.constant 1 : index
    %170 = memref.load %arg2[%c0_186, %c1_187] : memref<4x2xf32, #tpu.memory_space<smem>>
    %171 = vector.broadcast %170 : f32 to vector<8x8xf32>
    %172 = arith.mulf %169, %171 : vector<8x8xf32>
    %173 = arith.addf %167, %172 : vector<8x8xf32>
    %c0_188 = arith.constant 0 : index
    %c2_189 = arith.constant 2 : index
    %c1_190 = arith.constant 1 : index
    %c0_191 = arith.constant 0 : index
    %c0_192 = arith.constant 0 : index
    %174 = vector.load %arg1[%c0_188, %c2_189, %c1_190, %c0_191, %c0_192] : memref<1x4x4x8x8xf32, #tpu.memory_space<vmem>>, vector<1x1x1x8x8xf32>
    %175 = vector.shape_cast %174 : vector<1x1x1x8x8xf32> to vector<8x8xf32>
    %c1_193 = arith.constant 1 : index
    %c1_194 = arith.constant 1 : index
    %176 = memref.load %arg2[%c1_193, %c1_194] : memref<4x2xf32, #tpu.memory_space<smem>>
    %177 = vector.broadcast %176 : f32 to vector<8x8xf32>
    %178 = arith.mulf %175, %177 : vector<8x8xf32>
    %179 = arith.addf %173, %178 : vector<8x8xf32>
    %c0_195 = arith.constant 0 : index
    %c2_196 = arith.constant 2 : index
    %c2_197 = arith.constant 2 : index
    %c0_198 = arith.constant 0 : index
    %c0_199 = arith.constant 0 : index
    %180 = vector.load %arg1[%c0_195, %c2_196, %c2_197, %c0_198, %c0_199] : memref<1x4x4x8x8xf32, #tpu.memory_space<vmem>>, vector<1x1x1x8x8xf32>
    %181 = vector.shape_cast %180 : vector<1x1x1x8x8xf32> to vector<8x8xf32>
    %c2_200 = arith.constant 2 : index
    %c1_201 = arith.constant 1 : index
    %182 = memref.load %arg2[%c2_200, %c1_201] : memref<4x2xf32, #tpu.memory_space<smem>>
    %183 = vector.broadcast %182 : f32 to vector<8x8xf32>
    %184 = arith.mulf %181, %183 : vector<8x8xf32>
    %185 = arith.addf %179, %184 : vector<8x8xf32>
    %c0_202 = arith.constant 0 : index
    %c2_203 = arith.constant 2 : index
    %c3_204 = arith.constant 3 : index
    %c0_205 = arith.constant 0 : index
    %c0_206 = arith.constant 0 : index
    %186 = vector.load %arg1[%c0_202, %c2_203, %c3_204, %c0_205, %c0_206] : memref<1x4x4x8x8xf32, #tpu.memory_space<vmem>>, vector<1x1x1x8x8xf32>
    %187 = vector.shape_cast %186 : vector<1x1x1x8x8xf32> to vector<8x8xf32>
    %c3_207 = arith.constant 3 : index
    %c1_208 = arith.constant 1 : index
    %188 = memref.load %arg2[%c3_207, %c1_208] : memref<4x2xf32, #tpu.memory_space<smem>>
    %189 = vector.broadcast %188 : f32 to vector<8x8xf32>
    %190 = arith.mulf %187, %189 : vector<8x8xf32>
    %191 = arith.addf %185, %190 : vector<8x8xf32>
    %c0_209 = arith.constant 0 : index
    %c1_210 = arith.constant 1 : index
    %192 = memref.load %arg3[%c0_209, %c1_210] : memref<1x2xf32, #tpu.memory_space<smem>>
    %193 = vector.broadcast %192 : f32 to vector<8x8xf32>
    %194 = arith.addf %191, %193 : vector<8x8xf32>
    %cst_211 = arith.constant 0.000000e+00 : f32
    %195 = vector.broadcast %cst_211 : f32 to vector<8x8xf32>
    %196 = arith.maximumf %194, %195 : vector<8x8xf32>
    %c1_212 = arith.constant 1 : index
    %c1_213 = arith.constant 1 : index
    %c1_214 = arith.constant 1 : index
    %c0_215 = arith.constant 0 : index
    %197 = vector.load %arg9[%c1_212, %c1_213, %c1_214, %c0_215] : memref<4x2x9x9xf32, #tpu.memory_space<vmem>>, vector<1x1x8x8xf32>
    %198 = vector.shape_cast %197 : vector<1x1x8x8xf32> to vector<8x8xf32>
    %199 = vector.shape_cast %196 : vector<8x8xf32> to vector<1x1x8x8xf32>
    tpu.vector_store %arg9[%c1_212, %c1_213, %c1_214, %c0_215], %199 {strides = array<i32>} : memref<4x2x9x9xf32, #tpu.memory_space<vmem>>, vector<1x1x8x8xf32>,
    %cst_216 = arith.constant 0.000000e+00 : f32
    %200 = vector.broadcast %cst_216 : f32 to vector<8x8xf32>
    %c0_217 = arith.constant 0 : index
    %c3_218 = arith.constant 3 : index
    %c0_219 = arith.constant 0 : index
    %c0_220 = arith.constant 0 : index
    %c0_221 = arith.constant 0 : index
    %201 = vector.load %arg1[%c0_217, %c3_218, %c0_219, %c0_220, %c0_221] : memref<1x4x4x8x8xf32, #tpu.memory_space<vmem>>, vector<1x1x1x8x8xf32>
    %202 = vector.shape_cast %201 : vector<1x1x1x8x8xf32> to vector<8x8xf32>
    %c0_222 = arith.constant 0 : index
    %c0_223 = arith.constant 0 : index
    %203 = memref.load %arg2[%c0_222, %c0_223] : memref<4x2xf32, #tpu.memory_space<smem>>
    %204 = vector.broadcast %203 : f32 to vector<8x8xf32>
    %205 = arith.mulf %202, %204 : vector<8x8xf32>
    %206 = arith.addf %200, %205 : vector<8x8xf32>
    %c0_224 = arith.constant 0 : index
    %c3_225 = arith.constant 3 : index
    %c1_226 = arith.constant 1 : index
    %c0_227 = arith.constant 0 : index
    %c0_228 = arith.constant 0 : index
    %207 = vector.load %arg1[%c0_224, %c3_225, %c1_226, %c0_227, %c0_228] : memref<1x4x4x8x8xf32, #tpu.memory_space<vmem>>, vector<1x1x1x8x8xf32>
    %208 = vector.shape_cast %207 : vector<1x1x1x8x8xf32> to vector<8x8xf32>
    %c1_229 = arith.constant 1 : index
    %c0_230 = arith.constant 0 : index
    %209 = memref.load %arg2[%c1_229, %c0_230] : memref<4x2xf32, #tpu.memory_space<smem>>
    %210 = vector.broadcast %209 : f32 to vector<8x8xf32>
    %211 = arith.mulf %208, %210 : vector<8x8xf32>
    %212 = arith.addf %206, %211 : vector<8x8xf32>
    %c0_231 = arith.constant 0 : index
    %c3_232 = arith.constant 3 : index
    %c2_233 = arith.constant 2 : index
    %c0_234 = arith.constant 0 : index
    %c0_235 = arith.constant 0 : index
    %213 = vector.load %arg1[%c0_231, %c3_232, %c2_233, %c0_234, %c0_235] : memref<1x4x4x8x8xf32, #tpu.memory_space<vmem>>, vector<1x1x1x8x8xf32>
    %214 = vector.shape_cast %213 : vector<1x1x1x8x8xf32> to vector<8x8xf32>
    %c2_236 = arith.constant 2 : index
    %c0_237 = arith.constant 0 : index
    %215 = memref.load %arg2[%c2_236, %c0_237] : memref<4x2xf32, #tpu.memory_space<smem>>
    %216 = vector.broadcast %215 : f32 to vector<8x8xf32>
    %217 = arith.mulf %214, %216 : vector<8x8xf32>
    %218 = arith.addf %212, %217 : vector<8x8xf32>
    %c0_238 = arith.constant 0 : index
    %c3_239 = arith.constant 3 : index
    %c3_240 = arith.constant 3 : index
    %c0_241 = arith.constant 0 : index
    %c0_242 = arith.constant 0 : index
    %219 = vector.load %arg1[%c0_238, %c3_239, %c3_240, %c0_241, %c0_242] : memref<1x4x4x8x8xf32, #tpu.memory_space<vmem>>, vector<1x1x1x8x8xf32>
    %220 = vector.shape_cast %219 : vector<1x1x1x8x8xf32> to vector<8x8xf32>
    %c3_243 = arith.constant 3 : index
    %c0_244 = arith.constant 0 : index
    %221 = memref.load %arg2[%c3_243, %c0_244] : memref<4x2xf32, #tpu.memory_space<smem>>
    %222 = vector.broadcast %221 : f32 to vector<8x8xf32>
    %223 = arith.mulf %220, %222 : vector<8x8xf32>
    %224 = arith.addf %218, %223 : vector<8x8xf32>
    %c0_245 = arith.constant 0 : index
    %c0_246 = arith.constant 0 : index
    %225 = memref.load %arg3[%c0_245, %c0_246] : memref<1x2xf32, #tpu.memory_space<smem>>
    %226 = vector.broadcast %225 : f32 to vector<8x8xf32>
    %227 = arith.addf %224, %226 : vector<8x8xf32>
    %cst_247 = arith.constant 0.000000e+00 : f32
    %228 = vector.broadcast %cst_247 : f32 to vector<8x8xf32>
    %229 = arith.maximumf %227, %228 : vector<8x8xf32>
    %c0_248 = arith.constant 0 : index
    %c0_249 = arith.constant 0 : index
    %c1_250 = arith.constant 1 : index
    %c1_251 = arith.constant 1 : index
    %230 = vector.load %arg9[%c0_248, %c0_249, %c1_250, %c1_251] : memref<4x2x9x9xf32, #tpu.memory_space<vmem>>, vector<1x1x8x8xf32>
    %231 = vector.shape_cast %230 : vector<1x1x8x8xf32> to vector<8x8xf32>
    %232 = vector.shape_cast %229 : vector<8x8xf32> to vector<1x1x8x8xf32>
    tpu.vector_store %arg9[%c0_248, %c0_249, %c1_250, %c1_251], %232 {strides = array<i32>} : memref<4x2x9x9xf32, #tpu.memory_space<vmem>>, vector<1x1x8x8xf32>,
    %cst_252 = arith.constant 0.000000e+00 : f32
    %233 = vector.broadcast %cst_252 : f32 to vector<8x8xf32>
    %c0_253 = arith.constant 0 : index
    %c3_254 = arith.constant 3 : index
    %c0_255 = arith.constant 0 : index
    %c0_256 = arith.constant 0 : index
    %c0_257 = arith.constant 0 : index
    %234 = vector.load %arg1[%c0_253, %c3_254, %c0_255, %c0_256, %c0_257] : memref<1x4x4x8x8xf32, #tpu.memory_space<vmem>>, vector<1x1x1x8x8xf32>
    %235 = vector.shape_cast %234 : vector<1x1x1x8x8xf32> to vector<8x8xf32>
    %c0_258 = arith.constant 0 : index
    %c1_259 = arith.constant 1 : index
    %236 = memref.load %arg2[%c0_258, %c1_259] : memref<4x2xf32, #tpu.memory_space<smem>>
    %237 = vector.broadcast %236 : f32 to vector<8x8xf32>
    %238 = arith.mulf %235, %237 : vector<8x8xf32>
    %239 = arith.addf %233, %238 : vector<8x8xf32>
    %c0_260 = arith.constant 0 : index
    %c3_261 = arith.constant 3 : index
    %c1_262 = arith.constant 1 : index
    %c0_263 = arith.constant 0 : index
    %c0_264 = arith.constant 0 : index
    %240 = vector.load %arg1[%c0_260, %c3_261, %c1_262, %c0_263, %c0_264] : memref<1x4x4x8x8xf32, #tpu.memory_space<vmem>>, vector<1x1x1x8x8xf32>
    %241 = vector.shape_cast %240 : vector<1x1x1x8x8xf32> to vector<8x8xf32>
    %c1_265 = arith.constant 1 : index
    %c1_266 = arith.constant 1 : index
    %242 = memref.load %arg2[%c1_265, %c1_266] : memref<4x2xf32, #tpu.memory_space<smem>>
    %243 = vector.broadcast %242 : f32 to vector<8x8xf32>
    %244 = arith.mulf %241, %243 : vector<8x8xf32>
    %245 = arith.addf %239, %244 : vector<8x8xf32>
    %c0_267 = arith.constant 0 : index
    %c3_268 = arith.constant 3 : index
    %c2_269 = arith.constant 2 : index
    %c0_270 = arith.constant 0 : index
    %c0_271 = arith.constant 0 : index
    %246 = vector.load %arg1[%c0_267, %c3_268, %c2_269, %c0_270, %c0_271] : memref<1x4x4x8x8xf32, #tpu.memory_space<vmem>>, vector<1x1x1x8x8xf32>
    %247 = vector.shape_cast %246 : vector<1x1x1x8x8xf32> to vector<8x8xf32>
    %c2_272 = arith.constant 2 : index
    %c1_273 = arith.constant 1 : index
    %248 = memref.load %arg2[%c2_272, %c1_273] : memref<4x2xf32, #tpu.memory_space<smem>>
    %249 = vector.broadcast %248 : f32 to vector<8x8xf32>
    %250 = arith.mulf %247, %249 : vector<8x8xf32>
    %251 = arith.addf %245, %250 : vector<8x8xf32>
    %c0_274 = arith.constant 0 : index
    %c3_275 = arith.constant 3 : index
    %c3_276 = arith.constant 3 : index
    %c0_277 = arith.constant 0 : index
    %c0_278 = arith.constant 0 : index
    %252 = vector.load %arg1[%c0_274, %c3_275, %c3_276, %c0_277, %c0_278] : memref<1x4x4x8x8xf32, #tpu.memory_space<vmem>>, vector<1x1x1x8x8xf32>
    %253 = vector.shape_cast %252 : vector<1x1x1x8x8xf32> to vector<8x8xf32>
    %c3_279 = arith.constant 3 : index
    %c1_280 = arith.constant 1 : index
    %254 = memref.load %arg2[%c3_279, %c1_280] : memref<4x2xf32, #tpu.memory_space<smem>>
    %255 = vector.broadcast %254 : f32 to vector<8x8xf32>
    %256 = arith.mulf %253, %255 : vector<8x8xf32>
    %257 = arith.addf %251, %256 : vector<8x8xf32>
    %c0_281 = arith.constant 0 : index
    %c1_282 = arith.constant 1 : index
    %258 = memref.load %arg3[%c0_281, %c1_282] : memref<1x2xf32, #tpu.memory_space<smem>>
    %259 = vector.broadcast %258 : f32 to vector<8x8xf32>
    %260 = arith.addf %257, %259 : vector<8x8xf32>
    %cst_283 = arith.constant 0.000000e+00 : f32
    %261 = vector.broadcast %cst_283 : f32 to vector<8x8xf32>
    %262 = arith.maximumf %260, %261 : vector<8x8xf32>
    %c0_284 = arith.constant 0 : index
    %c1_285 = arith.constant 1 : index
    %c1_286 = arith.constant 1 : index
    %c1_287 = arith.constant 1 : index
    %263 = vector.load %arg9[%c0_284, %c1_285, %c1_286, %c1_287] : memref<4x2x9x9xf32, #tpu.memory_space<vmem>>, vector<1x1x8x8xf32>
    %264 = vector.shape_cast %263 : vector<1x1x8x8xf32> to vector<8x8xf32>
    %265 = vector.shape_cast %262 : vector<8x8xf32> to vector<1x1x8x8xf32>
    tpu.vector_store %arg9[%c0_284, %c1_285, %c1_286, %c1_287], %265 {strides = array<i32>} : memref<4x2x9x9xf32, #tpu.memory_space<vmem>>, vector<1x1x8x8xf32>,
    %cst_288 = arith.constant 0.000000e+00 : f32
    %266 = vector.broadcast %cst_288 : f32 to vector<8x8xf32>
    %c0_289 = arith.constant 0 : index
    %c0_290 = arith.constant 0 : index
    %c0_291 = arith.constant 0 : index
    %c0_292 = arith.constant 0 : index
    %267 = vector.load %arg9[%c0_289, %c0_290, %c0_291, %c0_292] : memref<4x2x9x9xf32, #tpu.memory_space<vmem>>, vector<1x1x8x8xf32>
    %268 = vector.shape_cast %267 : vector<1x1x8x8xf32> to vector<8x8xf32>
    %c0_293 = arith.constant 0 : index
    %c0_294 = arith.constant 0 : index
    %269 = memref.load %arg4[%c0_293, %c0_294] : memref<9x2xf32, #tpu.memory_space<smem>>
    %270 = vector.broadcast %269 : f32 to vector<8x8xf32>
    %271 = arith.mulf %268, %270 : vector<8x8xf32>
    %272 = arith.addf %266, %271 : vector<8x8xf32>
    %c1_295 = arith.constant 1 : index
    %c0_296 = arith.constant 0 : index
    %c0_297 = arith.constant 0 : index
    %c0_298 = arith.constant 0 : index
    %273 = vector.load %arg9[%c1_295, %c0_296, %c0_297, %c0_298] : memref<4x2x9x9xf32, #tpu.memory_space<vmem>>, vector<1x1x8x8xf32>
    %274 = vector.shape_cast %273 : vector<1x1x8x8xf32> to vector<8x8xf32>
    %c1_299 = arith.constant 1 : index
    %c0_300 = arith.constant 0 : index
    %275 = memref.load %arg4[%c1_299, %c0_300] : memref<9x2xf32, #tpu.memory_space<smem>>
    %276 = vector.broadcast %275 : f32 to vector<8x8xf32>
    %277 = arith.mulf %274, %276 : vector<8x8xf32>
    %278 = arith.addf %272, %277 : vector<8x8xf32>
    %c0_301 = arith.constant 0 : index
    %c0_302 = arith.constant 0 : index
    %c0_303 = arith.constant 0 : index
    %c1_304 = arith.constant 1 : index
    %279 = vector.load %arg9[%c0_301, %c0_302, %c0_303, %c1_304] : memref<4x2x9x9xf32, #tpu.memory_space<vmem>>, vector<1x1x8x8xf32>
    %280 = vector.shape_cast %279 : vector<1x1x8x8xf32> to vector<8x8xf32>
    %c2_305 = arith.constant 2 : index
    %c0_306 = arith.constant 0 : index
    %281 = memref.load %arg4[%c2_305, %c0_306] : memref<9x2xf32, #tpu.memory_space<smem>>
    %282 = vector.broadcast %281 : f32 to vector<8x8xf32>
    %283 = arith.mulf %280, %282 : vector<8x8xf32>
    %284 = arith.addf %278, %283 : vector<8x8xf32>
    %c2_307 = arith.constant 2 : index
    %c0_308 = arith.constant 0 : index
    %c0_309 = arith.constant 0 : index
    %c0_310 = arith.constant 0 : index
    %285 = vector.load %arg9[%c2_307, %c0_308, %c0_309, %c0_310] : memref<4x2x9x9xf32, #tpu.memory_space<vmem>>, vector<1x1x8x8xf32>
    %286 = vector.shape_cast %285 : vector<1x1x8x8xf32> to vector<8x8xf32>
    %c3_311 = arith.constant 3 : index
    %c0_312 = arith.constant 0 : index
    %287 = memref.load %arg4[%c3_311, %c0_312] : memref<9x2xf32, #tpu.memory_space<smem>>
    %288 = vector.broadcast %287 : f32 to vector<8x8xf32>
    %289 = arith.mulf %286, %288 : vector<8x8xf32>
    %290 = arith.addf %284, %289 : vector<8x8xf32>
    %c3_313 = arith.constant 3 : index
    %c0_314 = arith.constant 0 : index
    %c0_315 = arith.constant 0 : index
    %c0_316 = arith.constant 0 : index
    %291 = vector.load %arg9[%c3_313, %c0_314, %c0_315, %c0_316] : memref<4x2x9x9xf32, #tpu.memory_space<vmem>>, vector<1x1x8x8xf32>
    %292 = vector.shape_cast %291 : vector<1x1x8x8xf32> to vector<8x8xf32>
    %c4 = arith.constant 4 : index
    %c0_317 = arith.constant 0 : index
    %293 = memref.load %arg4[%c4, %c0_317] : memref<9x2xf32, #tpu.memory_space<smem>>
    %294 = vector.broadcast %293 : f32 to vector<8x8xf32>
    %295 = arith.mulf %292, %294 : vector<8x8xf32>
    %296 = arith.addf %290, %295 : vector<8x8xf32>
    %c2_318 = arith.constant 2 : index
    %c0_319 = arith.constant 0 : index
    %c0_320 = arith.constant 0 : index
    %c1_321 = arith.constant 1 : index
    %297 = vector.load %arg9[%c2_318, %c0_319, %c0_320, %c1_321] : memref<4x2x9x9xf32, #tpu.memory_space<vmem>>, vector<1x1x8x8xf32>
    %298 = vector.shape_cast %297 : vector<1x1x8x8xf32> to vector<8x8xf32>
    %c5 = arith.constant 5 : index
    %c0_322 = arith.constant 0 : index
    %299 = memref.load %arg4[%c5, %c0_322] : memref<9x2xf32, #tpu.memory_space<smem>>
    %300 = vector.broadcast %299 : f32 to vector<8x8xf32>
    %301 = arith.mulf %298, %300 : vector<8x8xf32>
    %302 = arith.addf %296, %301 : vector<8x8xf32>
    %c0_323 = arith.constant 0 : index
    %c0_324 = arith.constant 0 : index
    %c1_325 = arith.constant 1 : index
    %c0_326 = arith.constant 0 : index
    %303 = vector.load %arg9[%c0_323, %c0_324, %c1_325, %c0_326] : memref<4x2x9x9xf32, #tpu.memory_space<vmem>>, vector<1x1x8x8xf32>
    %304 = vector.shape_cast %303 : vector<1x1x8x8xf32> to vector<8x8xf32>
    %c6 = arith.constant 6 : index
    %c0_327 = arith.constant 0 : index
    %305 = memref.load %arg4[%c6, %c0_327] : memref<9x2xf32, #tpu.memory_space<smem>>
    %306 = vector.broadcast %305 : f32 to vector<8x8xf32>
    %307 = arith.mulf %304, %306 : vector<8x8xf32>
    %308 = arith.addf %302, %307 : vector<8x8xf32>
    %c1_328 = arith.constant 1 : index
    %c0_329 = arith.constant 0 : index
    %c1_330 = arith.constant 1 : index
    %c0_331 = arith.constant 0 : index
    %309 = vector.load %arg9[%c1_328, %c0_329, %c1_330, %c0_331] : memref<4x2x9x9xf32, #tpu.memory_space<vmem>>, vector<1x1x8x8xf32>
    %310 = vector.shape_cast %309 : vector<1x1x8x8xf32> to vector<8x8xf32>
    %c7 = arith.constant 7 : index
    %c0_332 = arith.constant 0 : index
    %311 = memref.load %arg4[%c7, %c0_332] : memref<9x2xf32, #tpu.memory_space<smem>>
    %312 = vector.broadcast %311 : f32 to vector<8x8xf32>
    %313 = arith.mulf %310, %312 : vector<8x8xf32>
    %314 = arith.addf %308, %313 : vector<8x8xf32>
    %c0_333 = arith.constant 0 : index
    %c0_334 = arith.constant 0 : index
    %c1_335 = arith.constant 1 : index
    %c1_336 = arith.constant 1 : index
    %315 = vector.load %arg9[%c0_333, %c0_334, %c1_335, %c1_336] : memref<4x2x9x9xf32, #tpu.memory_space<vmem>>, vector<1x1x8x8xf32>
    %316 = vector.shape_cast %315 : vector<1x1x8x8xf32> to vector<8x8xf32>
    %c8 = arith.constant 8 : index
    %c0_337 = arith.constant 0 : index
    %317 = memref.load %arg4[%c8, %c0_337] : memref<9x2xf32, #tpu.memory_space<smem>>
    %318 = vector.broadcast %317 : f32 to vector<8x8xf32>
    %319 = arith.mulf %316, %318 : vector<8x8xf32>
    %320 = arith.addf %314, %319 : vector<8x8xf32>
    %c0_338 = arith.constant 0 : index
    %c0_339 = arith.constant 0 : index
    %321 = memref.load %arg5[%c0_338, %c0_339] : memref<1x2xf32, #tpu.memory_space<smem>>
    %322 = vector.broadcast %321 : f32 to vector<8x8xf32>
    %323 = arith.addf %320, %322 : vector<8x8xf32>
    %cst_340 = arith.constant 0.000000e+00 : f32
    %324 = vector.broadcast %cst_340 : f32 to vector<8x8xf32>
    %325 = arith.maximumf %323, %324 : vector<8x8xf32>
    %cst_341 = arith.constant 0.000000e+00 : f32
    %326 = vector.broadcast %cst_341 : f32 to vector<8x8xf32>
    %c0_342 = arith.constant 0 : index
    %c1_343 = arith.constant 1 : index
    %c0_344 = arith.constant 0 : index
    %c0_345 = arith.constant 0 : index
    %327 = vector.load %arg9[%c0_342, %c1_343, %c0_344, %c0_345] : memref<4x2x9x9xf32, #tpu.memory_space<vmem>>, vector<1x1x8x8xf32>
    %328 = vector.shape_cast %327 : vector<1x1x8x8xf32> to vector<8x8xf32>
    %c0_346 = arith.constant 0 : index
    %c1_347 = arith.constant 1 : index
    %329 = memref.load %arg4[%c0_346, %c1_347] : memref<9x2xf32, #tpu.memory_space<smem>>
    %330 = vector.broadcast %329 : f32 to vector<8x8xf32>
    %331 = arith.mulf %328, %330 : vector<8x8xf32>
    %332 = arith.addf %326, %331 : vector<8x8xf32>
    %c1_348 = arith.constant 1 : index
    %c1_349 = arith.constant 1 : index
    %c0_350 = arith.constant 0 : index
    %c0_351 = arith.constant 0 : index
    %333 = vector.load %arg9[%c1_348, %c1_349, %c0_350, %c0_351] : memref<4x2x9x9xf32, #tpu.memory_space<vmem>>, vector<1x1x8x8xf32>
    %334 = vector.shape_cast %333 : vector<1x1x8x8xf32> to vector<8x8xf32>
    %c1_352 = arith.constant 1 : index
    %c1_353 = arith.constant 1 : index
    %335 = memref.load %arg4[%c1_352, %c1_353] : memref<9x2xf32, #tpu.memory_space<smem>>
    %336 = vector.broadcast %335 : f32 to vector<8x8xf32>
    %337 = arith.mulf %334, %336 : vector<8x8xf32>
    %338 = arith.addf %332, %337 : vector<8x8xf32>
    %c0_354 = arith.constant 0 : index
    %c1_355 = arith.constant 1 : index
    %c0_356 = arith.constant 0 : index
    %c1_357 = arith.constant 1 : index
    %339 = vector.load %arg9[%c0_354, %c1_355, %c0_356, %c1_357] : memref<4x2x9x9xf32, #tpu.memory_space<vmem>>, vector<1x1x8x8xf32>
    %340 = vector.shape_cast %339 : vector<1x1x8x8xf32> to vector<8x8xf32>
    %c2_358 = arith.constant 2 : index
    %c1_359 = arith.constant 1 : index
    %341 = memref.load %arg4[%c2_358, %c1_359] : memref<9x2xf32, #tpu.memory_space<smem>>
    %342 = vector.broadcast %341 : f32 to vector<8x8xf32>
    %343 = arith.mulf %340, %342 : vector<8x8xf32>
    %344 = arith.addf %338, %343 : vector<8x8xf32>
    %c2_360 = arith.constant 2 : index
    %c1_361 = arith.constant 1 : index
    %c0_362 = arith.constant 0 : index
    %c0_363 = arith.constant 0 : index
    %345 = vector.load %arg9[%c2_360, %c1_361, %c0_362, %c0_363] : memref<4x2x9x9xf32, #tpu.memory_space<vmem>>, vector<1x1x8x8xf32>
    %346 = vector.shape_cast %345 : vector<1x1x8x8xf32> to vector<8x8xf32>
    %c3_364 = arith.constant 3 : index
    %c1_365 = arith.constant 1 : index
    %347 = memref.load %arg4[%c3_364, %c1_365] : memref<9x2xf32, #tpu.memory_space<smem>>
    %348 = vector.broadcast %347 : f32 to vector<8x8xf32>
    %349 = arith.mulf %346, %348 : vector<8x8xf32>
    %350 = arith.addf %344, %349 : vector<8x8xf32>
    %c3_366 = arith.constant 3 : index
    %c1_367 = arith.constant 1 : index
    %c0_368 = arith.constant 0 : index
    %c0_369 = arith.constant 0 : index
    %351 = vector.load %arg9[%c3_366, %c1_367, %c0_368, %c0_369] : memref<4x2x9x9xf32, #tpu.memory_space<vmem>>, vector<1x1x8x8xf32>
    %352 = vector.shape_cast %351 : vector<1x1x8x8xf32> to vector<8x8xf32>
    %c4_370 = arith.constant 4 : index
    %c1_371 = arith.constant 1 : index
    %353 = memref.load %arg4[%c4_370, %c1_371] : memref<9x2xf32, #tpu.memory_space<smem>>
    %354 = vector.broadcast %353 : f32 to vector<8x8xf32>
    %355 = arith.mulf %352, %354 : vector<8x8xf32>
    %356 = arith.addf %350, %355 : vector<8x8xf32>
    %c2_372 = arith.constant 2 : index
    %c1_373 = arith.constant 1 : index
    %c0_374 = arith.constant 0 : index
    %c1_375 = arith.constant 1 : index
    %357 = vector.load %arg9[%c2_372, %c1_373, %c0_374, %c1_375] : memref<4x2x9x9xf32, #tpu.memory_space<vmem>>, vector<1x1x8x8xf32>
    %358 = vector.shape_cast %357 : vector<1x1x8x8xf32> to vector<8x8xf32>
    %c5_376 = arith.constant 5 : index
    %c1_377 = arith.constant 1 : index
    %359 = memref.load %arg4[%c5_376, %c1_377] : memref<9x2xf32, #tpu.memory_space<smem>>
    %360 = vector.broadcast %359 : f32 to vector<8x8xf32>
    %361 = arith.mulf %358, %360 : vector<8x8xf32>
    %362 = arith.addf %356, %361 : vector<8x8xf32>
    %c0_378 = arith.constant 0 : index
    %c1_379 = arith.constant 1 : index
    %c1_380 = arith.constant 1 : index
    %c0_381 = arith.constant 0 : index
    %363 = vector.load %arg9[%c0_378, %c1_379, %c1_380, %c0_381] : memref<4x2x9x9xf32, #tpu.memory_space<vmem>>, vector<1x1x8x8xf32>
    %364 = vector.shape_cast %363 : vector<1x1x8x8xf32> to vector<8x8xf32>
    %c6_382 = arith.constant 6 : index
    %c1_383 = arith.constant 1 : index
    %365 = memref.load %arg4[%c6_382, %c1_383] : memref<9x2xf32, #tpu.memory_space<smem>>
    %366 = vector.broadcast %365 : f32 to vector<8x8xf32>
    %367 = arith.mulf %364, %366 : vector<8x8xf32>
    %368 = arith.addf %362, %367 : vector<8x8xf32>
    %c1_384 = arith.constant 1 : index
    %c1_385 = arith.constant 1 : index
    %c1_386 = arith.constant 1 : index
    %c0_387 = arith.constant 0 : index
    %369 = vector.load %arg9[%c1_384, %c1_385, %c1_386, %c0_387] : memref<4x2x9x9xf32, #tpu.memory_space<vmem>>, vector<1x1x8x8xf32>
    %370 = vector.shape_cast %369 : vector<1x1x8x8xf32> to vector<8x8xf32>
    %c7_388 = arith.constant 7 : index
    %c1_389 = arith.constant 1 : index
    %371 = memref.load %arg4[%c7_388, %c1_389] : memref<9x2xf32, #tpu.memory_space<smem>>
    %372 = vector.broadcast %371 : f32 to vector<8x8xf32>
    %373 = arith.mulf %370, %372 : vector<8x8xf32>
    %374 = arith.addf %368, %373 : vector<8x8xf32>
    %c0_390 = arith.constant 0 : index
    %c1_391 = arith.constant 1 : index
    %c1_392 = arith.constant 1 : index
    %c1_393 = arith.constant 1 : index
    %375 = vector.load %arg9[%c0_390, %c1_391, %c1_392, %c1_393] : memref<4x2x9x9xf32, #tpu.memory_space<vmem>>, vector<1x1x8x8xf32>
    %376 = vector.shape_cast %375 : vector<1x1x8x8xf32> to vector<8x8xf32>
    %c8_394 = arith.constant 8 : index
    %c1_395 = arith.constant 1 : index
    %377 = memref.load %arg4[%c8_394, %c1_395] : memref<9x2xf32, #tpu.memory_space<smem>>
    %378 = vector.broadcast %377 : f32 to vector<8x8xf32>
    %379 = arith.mulf %376, %378 : vector<8x8xf32>
    %380 = arith.addf %374, %379 : vector<8x8xf32>
    %c0_396 = arith.constant 0 : index
    %c1_397 = arith.constant 1 : index
    %381 = memref.load %arg5[%c0_396, %c1_397] : memref<1x2xf32, #tpu.memory_space<smem>>
    %382 = vector.broadcast %381 : f32 to vector<8x8xf32>
    %383 = arith.addf %380, %382 : vector<8x8xf32>
    %cst_398 = arith.constant 0.000000e+00 : f32
    %384 = vector.broadcast %cst_398 : f32 to vector<8x8xf32>
    %385 = arith.maximumf %383, %384 : vector<8x8xf32>
    %cst_399 = arith.constant 0.000000e+00 : f32
    %386 = vector.broadcast %cst_399 : f32 to vector<8x8xf32>
    %c0_400 = arith.constant 0 : index
    %c0_401 = arith.constant 0 : index
    %387 = memref.load %arg6[%c0_400, %c0_401] : memref<2x4xf32, #tpu.memory_space<smem>>
    %388 = vector.broadcast %387 : f32 to vector<8x8xf32>
    %389 = arith.mulf %325, %388 : vector<8x8xf32>
    %390 = arith.addf %386, %389 : vector<8x8xf32>
    %c1_402 = arith.constant 1 : index
    %c0_403 = arith.constant 0 : index
    %391 = memref.load %arg6[%c1_402, %c0_403] : memref<2x4xf32, #tpu.memory_space<smem>>
    %392 = vector.broadcast %391 : f32 to vector<8x8xf32>
    %393 = arith.mulf %385, %392 : vector<8x8xf32>
    %394 = arith.addf %390, %393 : vector<8x8xf32>
    %c0_404 = arith.constant 0 : index
    %c0_405 = arith.constant 0 : index
    %395 = memref.load %arg7[%c0_404, %c0_405] : memref<1x4xf32, #tpu.memory_space<smem>>
    %396 = vector.broadcast %395 : f32 to vector<8x8xf32>
    %397 = arith.addf %394, %396 : vector<8x8xf32>
    %cst_406 = arith.constant 0.000000e+00 : f32
    %398 = vector.broadcast %cst_406 : f32 to vector<8x8xf32>
    %399 = arith.maximumf %397, %398 : vector<8x8xf32>
    %c0_407 = arith.constant 0 : index
    %c0_408 = arith.constant 0 : index
    %c0_409 = arith.constant 0 : index
    %c0_410 = arith.constant 0 : index
    %400 = vector.load %arg8[%c0_407, %c0_408, %c0_409, %c0_410] : memref<1x4x8x8xf32, #tpu.memory_space<vmem>>, vector<1x1x8x8xf32>
    %401 = vector.shape_cast %400 : vector<1x1x8x8xf32> to vector<8x8xf32>
    %402 = vector.shape_cast %399 : vector<8x8xf32> to vector<1x1x8x8xf32>
    tpu.vector_store %arg8[%c0_407, %c0_408, %c0_409, %c0_410], %402 {strides = array<i32>} : memref<1x4x8x8xf32, #tpu.memory_space<vmem>>, vector<1x1x8x8xf32>,
    %cst_411 = arith.constant 0.000000e+00 : f32
    %403 = vector.broadcast %cst_411 : f32 to vector<8x8xf32>
    %c0_412 = arith.constant 0 : index
    %c1_413 = arith.constant 1 : index
    %404 = memref.load %arg6[%c0_412, %c1_413] : memref<2x4xf32, #tpu.memory_space<smem>>
    %405 = vector.broadcast %404 : f32 to vector<8x8xf32>
    %406 = arith.mulf %325, %405 : vector<8x8xf32>
    %407 = arith.addf %403, %406 : vector<8x8xf32>
    %c1_414 = arith.constant 1 : index
    %c1_415 = arith.constant 1 : index
    %408 = memref.load %arg6[%c1_414, %c1_415] : memref<2x4xf32, #tpu.memory_space<smem>>
    %409 = vector.broadcast %408 : f32 to vector<8x8xf32>
    %410 = arith.mulf %385, %409 : vector<8x8xf32>
    %411 = arith.addf %407, %410 : vector<8x8xf32>
    %c0_416 = arith.constant 0 : index
    %c1_417 = arith.constant 1 : index
    %412 = memref.load %arg7[%c0_416, %c1_417] : memref<1x4xf32, #tpu.memory_space<smem>>
    %413 = vector.broadcast %412 : f32 to vector<8x8xf32>
    %414 = arith.addf %411, %413 : vector<8x8xf32>
    %cst_418 = arith.constant 0.000000e+00 : f32
    %415 = vector.broadcast %cst_418 : f32 to vector<8x8xf32>
    %416 = arith.maximumf %414, %415 : vector<8x8xf32>
    %c0_419 = arith.constant 0 : index
    %c1_420 = arith.constant 1 : index
    %c0_421 = arith.constant 0 : index
    %c0_422 = arith.constant 0 : index
    %417 = vector.load %arg8[%c0_419, %c1_420, %c0_421, %c0_422] : memref<1x4x8x8xf32, #tpu.memory_space<vmem>>, vector<1x1x8x8xf32>
    %418 = vector.shape_cast %417 : vector<1x1x8x8xf32> to vector<8x8xf32>
    %419 = vector.shape_cast %416 : vector<8x8xf32> to vector<1x1x8x8xf32>
    tpu.vector_store %arg8[%c0_419, %c1_420, %c0_421, %c0_422], %419 {strides = array<i32>} : memref<1x4x8x8xf32, #tpu.memory_space<vmem>>, vector<1x1x8x8xf32>,
    %cst_423 = arith.constant 0.000000e+00 : f32
    %420 = vector.broadcast %cst_423 : f32 to vector<8x8xf32>
    %c0_424 = arith.constant 0 : index
    %c2_425 = arith.constant 2 : index
    %421 = memref.load %arg6[%c0_424, %c2_425] : memref<2x4xf32, #tpu.memory_space<smem>>
    %422 = vector.broadcast %421 : f32 to vector<8x8xf32>
    %423 = arith.mulf %325, %422 : vector<8x8xf32>
    %424 = arith.addf %420, %423 : vector<8x8xf32>
    %c1_426 = arith.constant 1 : index
    %c2_427 = arith.constant 2 : index
    %425 = memref.load %arg6[%c1_426, %c2_427] : memref<2x4xf32, #tpu.memory_space<smem>>
    %426 = vector.broadcast %425 : f32 to vector<8x8xf32>
    %427 = arith.mulf %385, %426 : vector<8x8xf32>
    %428 = arith.addf %424, %427 : vector<8x8xf32>
    %c0_428 = arith.constant 0 : index
    %c2_429 = arith.constant 2 : index
    %429 = memref.load %arg7[%c0_428, %c2_429] : memref<1x4xf32, #tpu.memory_space<smem>>
    %430 = vector.broadcast %429 : f32 to vector<8x8xf32>
    %431 = arith.addf %428, %430 : vector<8x8xf32>
    %cst_430 = arith.constant 0.000000e+00 : f32
    %432 = vector.broadcast %cst_430 : f32 to vector<8x8xf32>
    %433 = arith.maximumf %431, %432 : vector<8x8xf32>
    %c0_431 = arith.constant 0 : index
    %c2_432 = arith.constant 2 : index
    %c0_433 = arith.constant 0 : index
    %c0_434 = arith.constant 0 : index
    %434 = vector.load %arg8[%c0_431, %c2_432, %c0_433, %c0_434] : memref<1x4x8x8xf32, #tpu.memory_space<vmem>>, vector<1x1x8x8xf32>
    %435 = vector.shape_cast %434 : vector<1x1x8x8xf32> to vector<8x8xf32>
    %436 = vector.shape_cast %433 : vector<8x8xf32> to vector<1x1x8x8xf32>
    tpu.vector_store %arg8[%c0_431, %c2_432, %c0_433, %c0_434], %436 {strides = array<i32>} : memref<1x4x8x8xf32, #tpu.memory_space<vmem>>, vector<1x1x8x8xf32>,
    %cst_435 = arith.constant 0.000000e+00 : f32
    %437 = vector.broadcast %cst_435 : f32 to vector<8x8xf32>
    %c0_436 = arith.constant 0 : index
    %c3_437 = arith.constant 3 : index
    %438 = memref.load %arg6[%c0_436, %c3_437] : memref<2x4xf32, #tpu.memory_space<smem>>
    %439 = vector.broadcast %438 : f32 to vector<8x8xf32>
    %440 = arith.mulf %325, %439 : vector<8x8xf32>
    %441 = arith.addf %437, %440 : vector<8x8xf32>
    %c1_438 = arith.constant 1 : index
    %c3_439 = arith.constant 3 : index
    %442 = memref.load %arg6[%c1_438, %c3_439] : memref<2x4xf32, #tpu.memory_space<smem>>
    %443 = vector.broadcast %442 : f32 to vector<8x8xf32>
    %444 = arith.mulf %385, %443 : vector<8x8xf32>
    %445 = arith.addf %441, %444 : vector<8x8xf32>
    %c0_440 = arith.constant 0 : index
    %c3_441 = arith.constant 3 : index
    %446 = memref.load %arg7[%c0_440, %c3_441] : memref<1x4xf32, #tpu.memory_space<smem>>
    %447 = vector.broadcast %446 : f32 to vector<8x8xf32>
    %448 = arith.addf %445, %447 : vector<8x8xf32>
    %cst_442 = arith.constant 0.000000e+00 : f32
    %449 = vector.broadcast %cst_442 : f32 to vector<8x8xf32>
    %450 = arith.maximumf %448, %449 : vector<8x8xf32>
    %c0_443 = arith.constant 0 : index
    %c3_444 = arith.constant 3 : index
    %c0_445 = arith.constant 0 : index
    %c0_446 = arith.constant 0 : index
    %451 = vector.load %arg8[%c0_443, %c3_444, %c0_445, %c0_446] : memref<1x4x8x8xf32, #tpu.memory_space<vmem>>, vector<1x1x8x8xf32>
    %452 = vector.shape_cast %451 : vector<1x1x8x8xf32> to vector<8x8xf32>
    %453 = vector.shape_cast %450 : vector<8x8xf32> to vector<1x1x8x8xf32>
    tpu.vector_store %arg8[%c0_443, %c3_444, %c0_445, %c0_446], %453 {strides = array<i32>} : memref<1x4x8x8xf32, #tpu.memory_space<vmem>>, vector<1x1x8x8xf32>,
    return
  }
  func.func @transform_0(%arg0: i32) -> (i32, i32, i32, i32, i32) {
    %c0_i32 = arith.constant 0 : i32
    %c0_i32_0 = arith.constant 0 : i32
    %c0_i32_1 = arith.constant 0 : i32
    %c0_i32_2 = arith.constant 0 : i32
    %c0_i32_3 = arith.constant 0 : i32
    return %arg0, %c0_i32, %c0_i32_0, %c0_i32_1, %c0_i32_2 : i32, i32, i32, i32, i32
  }
  func.func @transform_1(%arg0: i32) -> (i32, i32) {
    %c0_i32 = arith.constant 0 : i32
    %c0_i32_0 = arith.constant 0 : i32
    %c0_i32_1 = arith.constant 0 : i32
    return %c0_i32, %c0_i32_0 : i32, i32
  }
  func.func @transform_2(%arg0: i32) -> (i32, i32) {
    %c0_i32 = arith.constant 0 : i32
    %c0_i32_0 = arith.constant 0 : i32
    %c0_i32_1 = arith.constant 0 : i32
    return %c0_i32, %c0_i32_0 : i32, i32
  }
  func.func @transform_3(%arg0: i32) -> (i32, i32) {
    %c0_i32 = arith.constant 0 : i32
    %c0_i32_0 = arith.constant 0 : i32
    %c0_i32_1 = arith.constant 0 : i32
    return %c0_i32, %c0_i32_0 : i32, i32
  }
  func.func @transform_4(%arg0: i32) -> (i32, i32) {
    %c0_i32 = arith.constant 0 : i32
    %c0_i32_0 = arith.constant 0 : i32
    %c0_i32_1 = arith.constant 0 : i32
    return %c0_i32, %c0_i32_0 : i32, i32
  }
  func.func @transform_5(%arg0: i32) -> (i32, i32) {
    %c0_i32 = arith.constant 0 : i32
    %c0_i32_0 = arith.constant 0 : i32
    %c0_i32_1 = arith.constant 0 : i32
    return %c0_i32, %c0_i32_0 : i32, i32
  }
  func.func @transform_6(%arg0: i32) -> (i32, i32) {
    %c0_i32 = arith.constant 0 : i32
    %c0_i32_0 = arith.constant 0 : i32
    %c0_i32_1 = arith.constant 0 : i32
    return %c0_i32, %c0_i32_0 : i32, i32
  }
  func.func @transform_7(%arg0: i32) -> (i32, i32, i32, i32) {
    %c0_i32 = arith.constant 0 : i32
    %c0_i32_0 = arith.constant 0 : i32
    %c0_i32_1 = arith.constant 0 : i32
    %c0_i32_2 = arith.constant 0 : i32
    return %arg0, %c0_i32, %c0_i32_0, %c0_i32_1 : i32, i32, i32, i32
  }
}

</mosaic_0001>

<llo_original>
// kernel: res_conv_forward.1
$region0: #{res_conv_forward.1}
  #allocation0 [shape = 'u32[]', space=smem, size = 0x4, offset = 0x4, fixed_abs, tag = 'smem constant byte address 0x4 - core index']
  #allocation1 [shape = 'u32[144,128]{1,0:T(1,128)}', space=vmem, size = 0x12000, scoped, tag = 'internal scratch']
  #allocation2 [shape = 'f32[4,2,9,9]{3,2,1,0:T(8,128)}', space=vmem, size = 0x10000, scoped, tag = 'scratch operand']
  %s0 = inlined_call_operand.vmem [shape: f32[2,4,4,8,8], index: 0, kind: input, shape index: {}]
  %s1 = inlined_call_operand.vmem [shape: f32[4,2], index: 1, kind: input, shape index: {}]
  %s2 = inlined_call_operand.vmem [shape: f32[1,2], index: 2, kind: input, shape index: {}]
  %s3 = inlined_call_operand.vmem [shape: f32[9,2], index: 3, kind: input, shape index: {}]
  %s4 = inlined_call_operand.vmem [shape: f32[1,2], index: 4, kind: input, shape index: {}]
  %s5 = inlined_call_operand.vmem [shape: f32[2,4], index: 5, kind: input, shape index: {}]
  %s6 = inlined_call_operand.vmem [shape: f32[1,4], index: 6, kind: input, shape index: {}]
  %s7 = inlined_call_operand.hbm [shape: f32[2,4,8,8], index: 7, kind: output, shape index: {}]
  %s8 = sld [smem:[#allocation0]]
  $region85: #{res_conv_forward.1} parent=0
    _
  %s10 = ssub.s32 1, %s8
  %s11 = scalar_select 0, %s10, %s8
  $region1: #{res_conv_forward.1} parent=0
    #allocation3 [shape = 'u8[2048]{0}', space=smem, size = 0x800, scoped, tag = 'input window, operand 1, single buffered']
    #allocation4 [shape = 's32[2]{0}', space=sflag, size = 0x8, scoped, tag = 'scoped memory for res_conv_forward.1']
    #allocation5 [shape = 's32[2]{0}', space=sflag, size = 0x8, scoped, tag = 'scoped memory for res_conv_forward.1']
    #allocation6 [shape = 'u8[512]{0}', space=smem, size = 0x200, scoped, tag = 'input window, operand 2, single buffered']
    #allocation7 [shape = 's32[1]{0}', space=sflag, size = 0x4, scoped, tag = 'scoped memory for res_conv_forward.1']
    #allocation8 [shape = 'u8[8192]{0}', space=smem, size = 0x2000, scoped, tag = 'input window, operand 3, single buffered']
    #allocation9 [shape = 'u8[512]{0}', space=smem, size = 0x200, scoped, tag = 'input window, operand 4, single buffered']
    #allocation10 [shape = 's32[1]{0}', space=sflag, size = 0x4, scoped, tag = 'scoped memory for res_conv_forward.1']
    #allocation11 [shape = 'u8[1024]{0}', space=smem, size = 0x400, scoped, tag = 'input window, operand 5, single buffered']
    #allocation12 [shape = 'u8[512]{0}', space=smem, size = 0x200, scoped, tag = 'input window, operand 6, single buffered']
    #allocation13 [shape = 's32[1]{0}', space=sflag, size = 0x4, scoped, tag = 'scoped memory for res_conv_forward.1']
    #allocation14 [shape = 'u8[32768]{0}', space=vmem, size = 0x8000, scoped, tag = 'output window, operand 0']
    %12 = vsyncpa [#allocation5], 0
    %13 = vsyncpa [#allocation7], 0
    %14 = vsyncpa [#allocation10], 0
    %15 = vsyncpa [#allocation13], 0
    %16 = vsyncpa [#allocation4], 0
    %s17 = scalar_lea.sflag [#allocation4], 1
    %18 = vsyncpa %s17, 0
    loop: start=0, step=1, limit=4
    $region2: #{res_conv_forward.1} parent=1 // loop_pre_header
      _
    $region3: #{res_conv_forward.1} parent=1 // loop_header
      %s20 = sphi 0, %s24
      %p21 = scmp.ge.s32.totalorder %s20, 4
      %s30 = sphi 0, %s32
      %s33 = sphi 0, %s30
      %s34 = sphi 0, %s33
      %s50 = sphi 0, %s34
      %s54 = sphi 0, %s54
      %s56 = sphi 0, %s54
      %s57 = sphi 0, %s56
      %s71 = sphi 0, %s57
      %s75 = sphi 0, %s75
      %s77 = sphi 0, %s75
      %s78 = sphi 0, %s77
      %s92 = sphi 0, %s78
      %s96 = sphi 0, %s96
      %s98 = sphi 0, %s96
      %s99 = sphi 0, %s98
      %s113 = sphi 0, %s99
      %s117 = sphi 0, %s117
      %s119 = sphi 0, %s117
      %s120 = sphi 0, %s119
      %s134 = sphi 0, %s120
      %s138 = sphi 0, %s138
      %s140 = sphi 0, %s138
      %s141 = sphi 0, %s140
      %s155 = sphi 0, %s141
      %s159 = sphi 0, %s159
      %s161 = sphi 0, %s159
      %s162 = sphi 0, %s161
      %s176 = sphi 0, %s162
      %s182 = sphi 0, %s184
      %s185 = sphi 0, %s182
      %s186 = sphi 0, %s185
      %s202 = sphi 0, %s186
    $region4: #{res_conv_forward.1} parent=1 // loop_header_branch
      %23 = sbr.rel (%p21) target = $region8
    $region5: #{res_conv_forward.1} parent=1 // loop_body
      %s25 = ssub.s32 %s20, 1
      %s26 = ssub.s32 %s20, 2
      %s27 = sadd.s32 %s20, 1
      %s28 = ssub.s32 %s20, %s27
      %p29 = scmp.eq.s32.totalorder %s28, 0
      %s31 = sadd.s32 %s30, 1
      %s32 = scalar_select %p29, %s30, %s31
      %p35 = pneg %p29
      %p36 = scmp.eq.s32.totalorder %s20, 1
      %p37 = por %p35, %p36
      %p38 = scmp.ne.s32.totalorder %s30, %s33
      %p39 = scmp.eq.s32.totalorder %s20, 0
      %p40 = por %p38, %p39
      %p41 = scmp.ne.s32.totalorder %s30, %s33
      %p42 = scmp.eq.s32.totalorder %s25, 1
      %p43 = por %p41, %p42
      %p44 = scmp.ne.s32.totalorder %s33, %s34
      %p45 = scmp.eq.s32.totalorder %s25, 0
      %p46 = por %p44, %p45
      %p47 = scmp.ne.s32.totalorder %s33, %s34
      %p48 = scmp.eq.s32.totalorder %s26, 1
      %p49 = por %p47, %p48
      %p51 = scmp.ne.s32.totalorder %s34, %s50
      %p52 = scmp.eq.s32.totalorder %s26, 0
      %p53 = por %p51, %p52
      %s55 = sadd.s32 %s54, 1
      %p58 = scmp.eq.s32.totalorder %s20, 1
      %p59 = scmp.ne.s32.totalorder %s54, %s56
      %p60 = scmp.eq.s32.totalorder %s20, 0
      %p61 = por %p59, %p60
      %p62 = scmp.ne.s32.totalorder %s54, %s56
      %p63 = scmp.eq.s32.totalorder %s25, 1
      %p64 = por %p62, %p63
      %p65 = scmp.ne.s32.totalorder %s56, %s57
      %p66 = scmp.eq.s32.totalorder %s25, 0
      %p67 = por %p65, %p66
      %p68 = scmp.ne.s32.totalorder %s56, %s57
      %p69 = scmp.eq.s32.totalorder %s26, 1
      %p70 = por %p68, %p69
      %p72 = scmp.ne.s32.totalorder %s57, %s71
      %p73 = scmp.eq.s32.totalorder %s26, 0
      %p74 = por %p72, %p73
      %s76 = sadd.s32 %s75, 1
      %p79 = scmp.eq.s32.totalorder %s20, 1
      %p80 = scmp.ne.s32.totalorder %s75, %s77
      %p81 = scmp.eq.s32.totalorder %s20, 0
      %p82 = por %p80, %p81
      %p83 = scmp.ne.s32.totalorder %s75, %s77
      %p84 = scmp.eq.s32.totalorder %s25, 1
      %p85 = por %p83, %p84
      %p86 = scmp.ne.s32.totalorder %s77, %s78
      %p87 = scmp.eq.s32.totalorder %s25, 0
      %p88 = por %p86, %p87
      %p89 = scmp.ne.s32.totalorder %s77, %s78
      %p90 = scmp.eq.s32.totalorder %s26, 1
      %p91 = por %p89, %p90
      %p93 = scmp.ne.s32.totalorder %s78, %s92
      %p94 = scmp.eq.s32.totalorder %s26, 0
      %p95 = por %p93, %p94
      %s97 = sadd.s32 %s96, 1
      %p100 = scmp.eq.s32.totalorder %s20, 1
      %p101 = scmp.ne.s32.totalorder %s96, %s98
      %p102 = scmp.eq.s32.totalorder %s20, 0
      %p103 = por %p101, %p102
      %p104 = scmp.ne.s32.totalorder %s96, %s98
      %p105 = scmp.eq.s32.totalorder %s25, 1
      %p106 = por %p104, %p105
      %p107 = scmp.ne.s32.totalorder %s98, %s99
      %p108 = scmp.eq.s32.totalorder %s25, 0
      %p109 = por %p107, %p108
      %p110 = scmp.ne.s32.totalorder %s98, %s99
      %p111 = scmp.eq.s32.totalorder %s26, 1
      %p112 = por %p110, %p111
      %p114 = scmp.ne.s32.totalorder %s99, %s113
      %p115 = scmp.eq.s32.totalorder %s26, 0
      %p116 = por %p114, %p115
      %s118 = sadd.s32 %s117, 1
      %p121 = scmp.eq.s32.totalorder %s20, 1
      %p122 = scmp.ne.s32.totalorder %s117, %s119
      %p123 = scmp.eq.s32.totalorder %s20, 0
      %p124 = por %p122, %p123
      %p125 = scmp.ne.s32.totalorder %s117, %s119
      %p126 = scmp.eq.s32.totalorder %s25, 1
      %p127 = por %p125, %p126
      %p128 = scmp.ne.s32.totalorder %s119, %s120
      %p129 = scmp.eq.s32.totalorder %s25, 0
      %p130 = por %p128, %p129
      %p131 = scmp.ne.s32.totalorder %s119, %s120
      %p132 = scmp.eq.s32.totalorder %s26, 1
      %p133 = por %p131, %p132
      %p135 = scmp.ne.s32.totalorder %s120, %s134
      %p136 = scmp.eq.s32.totalorder %s26, 0
      %p137 = por %p135, %p136
      %s139 = sadd.s32 %s138, 1
      %p142 = scmp.eq.s32.totalorder %s20, 1
      %p143 = scmp.ne.s32.totalorder %s138, %s140
      %p144 = scmp.eq.s32.totalorder %s20, 0
      %p145 = por %p143, %p144
      %p146 = scmp.ne.s32.totalorder %s138, %s140
      %p147 = scmp.eq.s32.totalorder %s25, 1
      %p148 = por %p146, %p147
      %p149 = scmp.ne.s32.totalorder %s140, %s141
      %p150 = scmp.eq.s32.totalorder %s25, 0
      %p151 = por %p149, %p150
      %p152 = scmp.ne.s32.totalorder %s140, %s141
      %p153 = scmp.eq.s32.totalorder %s26, 1
      %p154 = por %p152, %p153
      %p156 = scmp.ne.s32.totalorder %s141, %s155
      %p157 = scmp.eq.s32.totalorder %s26, 0
      %p158 = por %p156, %p157
      %s160 = sadd.s32 %s159, 1
      %p163 = scmp.eq.s32.totalorder %s20, 1
      %p164 = scmp.ne.s32.totalorder %s159, %s161
      %p165 = scmp.eq.s32.totalorder %s20, 0
      %p166 = por %p164, %p165
      %p167 = scmp.ne.s32.totalorder %s159, %s161
      %p168 = scmp.eq.s32.totalorder %s25, 1
      %p169 = por %p167, %p168
      %p170 = scmp.ne.s32.totalorder %s161, %s162
      %p171 = scmp.eq.s32.totalorder %s25, 0
      %p172 = por %p170, %p171
      %p173 = scmp.ne.s32.totalorder %s161, %s162
      %p174 = scmp.eq.s32.totalorder %s26, 1
      %p175 = por %p173, %p174
      %p177 = scmp.ne.s32.totalorder %s162, %s176
      %p178 = scmp.eq.s32.totalorder %s26, 0
      %p179 = por %p177, %p178
      %s180 = ssub.s32 %s20, %s27
      %p181 = scmp.eq.s32.totalorder %s180, 0
      %s183 = sadd.s32 %s182, 1
      %s184 = scalar_select %p181, %s182, %s183
      %p187 = pneg %p181
      %p188 = scmp.eq.s32.totalorder %s20, 1
      %p189 = por %p187, %p188
      %p190 = scmp.ne.s32.totalorder %s182, %s185
      %p191 = scmp.eq.s32.totalorder %s20, 0
      %p192 = por %p190, %p191
      %p193 = scmp.ne.s32.totalorder %s182, %s185
      %p194 = scmp.eq.s32.totalorder %s25, 1
      %p195 = por %p193, %p194
      %p196 = scmp.ne.s32.totalorder %s185, %s186
      %p197 = scmp.eq.s32.totalorder %s25, 0
      %p198 = por %p196, %p197
      %p199 = scmp.ne.s32.totalorder %s185, %s186
      %p200 = scmp.eq.s32.totalorder %s26, 1
      %p201 = por %p199, %p200
      %p203 = scmp.ne.s32.totalorder %s186, %s202
      %p204 = scmp.eq.s32.totalorder %s26, 0
      %p205 = por %p203, %p204
      %p206 = scmp.le.s32.totalorder 1, %s20
      %p207 = scmp.lt.s32.totalorder %s20, 3
      %p208 = pnand %p206, %p207
      %p209 = pneg %p208
      // Predicated region
      $region9: #{res_conv_forward.1} parent=5 // pred_check
        _
      $region10: #{res_conv_forward.1} parent=5 // pred_check_branch
        %211 = sbr.rel (%p208) target = $region12
      $region11: #{res_conv_forward.1} parent=5 // pred_region
        %s212 = ssub.s32 %s20, 1
        // Predicated region
        $region13: #{res_conv_forward.1} parent=11 // pred_check
          %p213 = pneg %p67
        $region14: #{res_conv_forward.1} parent=11 // pred_check_branch
          %215 = sbr.rel (%p213) target = $region16
        $region15: #{res_conv_forward.1} parent=11 // pred_region
          %s217 = ssub.s32 64, 64
          %218 = vsyncadd [#allocation5], %s217
          %s220 = sshll.u32 %s1, 4
          %s221 = int_to_ptr.vmem [resolvable:$true] %s220
          %223 = dma.vmem_to_smem %s221, 64, [#allocation3], [#allocation5]
        $region16: #{res_conv_forward.1} parent=11 // pred_fallthru
          _
        // Predicated region
        $region17: #{res_conv_forward.1} parent=11 // pred_check
          %p224 = pneg %p88
        $region18: #{res_conv_forward.1} parent=11 // pred_check_branch
          %226 = sbr.rel (%p224) target = $region20
        $region19: #{res_conv_forward.1} parent=11 // pred_region
          %s228 = ssub.s32 16, 16
          %229 = vsyncadd [#allocation7], %s228
          %s231 = sshll.u32 %s2, 4
          %s232 = int_to_ptr.vmem [resolvable:$true] %s231
          %234 = dma.vmem_to_smem %s232, 16, [#allocation6], [#allocation7]
        $region20: #{res_conv_forward.1} parent=11 // pred_fallthru
          _
        // Predicated region
        $region21: #{res_conv_forward.1} parent=11 // pred_check
          %p235 = pneg %p109
        $region22: #{res_conv_forward.1} parent=11 // pred_check_branch
          %237 = sbr.rel (%p235) target = $region24
        $region23: #{res_conv_forward.1} parent=11 // pred_region
          %s239 = ssub.s32 256, 256
          %240 = vsyncadd [#allocation7], %s239
          %s241 = sshll.u32 %s3, 4
          %s242 = int_to_ptr.vmem [resolvable:$true] %s241
          %247 = dma.vmem_to_smem %s242, 256, [#allocation8], [#allocation7], 128, 128, 8
        $region24: #{res_conv_forward.1} parent=11 // pred_fallthru
          _
        // Predicated region
        $region25: #{res_conv_forward.1} parent=11 // pred_check
          %p248 = pneg %p130
        $region26: #{res_conv_forward.1} parent=11 // pred_check_branch
          %250 = sbr.rel (%p248) target = $region28
        $region27: #{res_conv_forward.1} parent=11 // pred_region
          %s252 = ssub.s32 16, 16
          %253 = vsyncadd [#allocation10], %s252
          %s255 = sshll.u32 %s4, 4
          %s256 = int_to_ptr.vmem [resolvable:$true] %s255
          %258 = dma.vmem_to_smem %s256, 16, [#allocation9], [#allocation10]
        $region28: #{res_conv_forward.1} parent=11 // pred_fallthru
          _
        // Predicated region
        $region29: #{res_conv_forward.1} parent=11 // pred_check
          %p259 = pneg %p151
        $region30: #{res_conv_forward.1} parent=11 // pred_check_branch
          %261 = sbr.rel (%p259) target = $region32
        $region31: #{res_conv_forward.1} parent=11 // pred_region
          %s263 = ssub.s32 32, 32
          %264 = vsyncadd [#allocation10], %s263
          %s266 = sshll.u32 %s5, 4
          %s267 = int_to_ptr.vmem [resolvable:$true] %s266
          %269 = dma.vmem_to_smem %s267, 32, [#allocation11], [#allocation10]
        $region32: #{res_conv_forward.1} parent=11 // pred_fallthru
          _
        // Predicated region
        $region33: #{res_conv_forward.1} parent=11 // pred_check
          %p270 = pneg %p172
        $region34: #{res_conv_forward.1} parent=11 // pred_check_branch
          %272 = sbr.rel (%p270) target = $region36
        $region35: #{res_conv_forward.1} parent=11 // pred_region
          %s274 = ssub.s32 16, 16
          %275 = vsyncadd [#allocation13], %s274
          %s277 = sshll.u32 %s6, 4
          %s278 = int_to_ptr.vmem [resolvable:$true] %s277
          %280 = dma.vmem_to_smem %s278, 16, [#allocation12], [#allocation13]
        $region36: #{res_conv_forward.1} parent=11 // pred_fallthru
          _
      $region12: #{res_conv_forward.1} parent=5 // pred_fallthru
        _
      %p281 = scmp.lt.s32.totalorder %s20, 2
      // Predicated region
      $region37: #{res_conv_forward.1} parent=5 // pred_check
        %p282 = pneg %p281
      $region38: #{res_conv_forward.1} parent=5 // pred_check_branch
        %284 = sbr.rel (%p282) target = $region40
      $region39: #{res_conv_forward.1} parent=5 // pred_region
        // Predicated region
        $region41: #{res_conv_forward.1} parent=39 // pred_check
          %p285 = pneg %p40
        $region42: #{res_conv_forward.1} parent=39 // pred_check_branch
          %287 = sbr.rel (%p285) target = $region44
        $region43: #{res_conv_forward.1} parent=39 // pred_region
          %p288 = scmp.lt.s32.totalorder %s20, 1
          %s289 = scalar_select %p288, %s20, 1
          %s290 = smul.addr %s289, 16
          %s291 = smul.addr %s290, 8
          %s292 = scalar_lea.vmem %s0, %s291
        $region44: #{res_conv_forward.1} parent=39 // pred_fallthru
          _
      $region40: #{res_conv_forward.1} parent=5 // pred_fallthru
        _
      %p293 = scmp.le.s32.totalorder 1, %s20
      %p294 = scmp.lt.s32.totalorder %s20, 3
      %p295 = pnand %p293, %p294
      %p296 = pneg %p295
      // Predicated region
      $region45: #{res_conv_forward.1} parent=5 // pred_check
        _
      $region46: #{res_conv_forward.1} parent=5 // pred_check_branch
        %298 = sbr.rel (%p295) target = $region48
      $region47: #{res_conv_forward.1} parent=5 // pred_region
        %s299 = ssub.s32 %s20, 1
        // Predicated region
        $region49: #{res_conv_forward.1} parent=47 // pred_check
          %p300 = pneg %p67
        $region50: #{res_conv_forward.1} parent=47 // pred_check_branch
          %302 = sbr.rel (%p300) target = $region52
        $region51: #{res_conv_forward.1} parent=47 // pred_region
          %303 = dma.done [#allocation5], 64
        $region52: #{res_conv_forward.1} parent=47 // pred_fallthru
          _
        // Predicated region
        $region53: #{res_conv_forward.1} parent=47 // pred_check
          %p304 = pneg %p88
        $region54: #{res_conv_forward.1} parent=47 // pred_check_branch
          %306 = sbr.rel (%p304) target = $region56
        $region55: #{res_conv_forward.1} parent=47 // pred_region
          %307 = dma.done [#allocation7], 16
        $region56: #{res_conv_forward.1} parent=47 // pred_fallthru
          _
        // Predicated region
        $region57: #{res_conv_forward.1} parent=47 // pred_check
          %p308 = pneg %p109
        $region58: #{res_conv_forward.1} parent=47 // pred_check_branch
          %310 = sbr.rel (%p308) target = $region60
        $region59: #{res_conv_forward.1} parent=47 // pred_region
          %311 = dma.done [#allocation7], 256
        $region60: #{res_conv_forward.1} parent=47 // pred_fallthru
          _
        // Predicated region
        $region61: #{res_conv_forward.1} parent=47 // pred_check
          %p312 = pneg %p130
        $region62: #{res_conv_forward.1} parent=47 // pred_check_branch
          %314 = sbr.rel (%p312) target = $region64
        $region63: #{res_conv_forward.1} parent=47 // pred_region
          %315 = dma.done [#allocation10], 16
        $region64: #{res_conv_forward.1} parent=47 // pred_fallthru
          _
        // Predicated region
        $region65: #{res_conv_forward.1} parent=47 // pred_check
          %p316 = pneg %p151
        $region66: #{res_conv_forward.1} parent=47 // pred_check_branch
          %318 = sbr.rel (%p316) target = $region68
        $region67: #{res_conv_forward.1} parent=47 // pred_region
          %319 = dma.done [#allocation10], 32
        $region68: #{res_conv_forward.1} parent=47 // pred_fallthru
          _
        // Predicated region
        $region69: #{res_conv_forward.1} parent=47 // pred_check
          %p320 = pneg %p172
        $region70: #{res_conv_forward.1} parent=47 // pred_check_branch
          %322 = sbr.rel (%p320) target = $region72
        $region71: #{res_conv_forward.1} parent=47 // pred_region
          %323 = dma.done [#allocation13], 16
        $region72: #{res_conv_forward.1} parent=47 // pred_fallthru
          _
        %324 = sfence
        %p325 = scmp.lt.s32.totalorder %s25, 1
        %s326 = scalar_select %p325, %s25, 1
        %s327 = smul.addr %s326, 16
        %s328 = smul.addr %s327, 8
        %s329 = scalar_lea.vmem %s0, %s328
        %p330 = pneg %p46
        %p331 = pneg %p43
        %p332 = pneg %p67
        %p333 = pneg %p64
        %p334 = pneg %p88
        %p335 = pneg %p85
        %p336 = pneg %p109
        %p337 = pneg %p106
        %p338 = pneg %p130
        %p339 = pneg %p127
        %p340 = pneg %p151
        %p341 = pneg %p148
        %p342 = pneg %p172
        %p343 = pneg %p169
        %p344 = pneg %p198
        %p345 = pneg %p195
        %s346 = sand.u32 %s185, 1
        %s347 = scalar_lea.sflag [#allocation4], %s346
        %s348 = sand.u32 %s185, 1
        %s349 = smul.addr %s348, 32
        %s350 = scalar_lea.vmem [#allocation14], %s349
        %p351 = scmp.lt.s32.totalorder %s25, 1
        %s352 = scalar_select %p351, %s25, 1
        %s353 = smul.addr %s352, 16
        %s354 = smul.addr %s353, 8
        %s355 = scalar_lea.vmem %s0, %s354
        %vm356 = vcmask 72704
        %357 = vst.msk [vmem:[#allocation2] sm:$0xff] %vm356, 0.0
        %vm358 = vcmask 65536
        %359 = vst.msk [vmem:[#allocation2 + $0x8] sm:$0x1] %vm358, 0.0
        %360 = vst.msk [vmem:[#allocation2 + $0x10] sm:$0xff] %vm356, 0.0
        %361 = vst.msk [vmem:[#allocation2 + $0x18] sm:$0x1] %vm358, 0.0
        %362 = vst.msk [vmem:[#allocation2 + $0x20] sm:$0xff] %vm356, 0.0
        %363 = vst.msk [vmem:[#allocation2 + $0x28] sm:$0x1] %vm358, 0.0
        %364 = vst.msk [vmem:[#allocation2 + $0x30] sm:$0xff] %vm356, 0.0
        %365 = vst.msk [vmem:[#allocation2 + $0x38] sm:$0x1] %vm358, 0.0
        %366 = vst.msk [vmem:[#allocation2 + $0x40] sm:$0xff] %vm356, 0.0
        %367 = vst.msk [vmem:[#allocation2 + $0x48] sm:$0x1] %vm358, 0.0
        %368 = vst.msk [vmem:[#allocation2 + $0x50] sm:$0xff] %vm356, 0.0
        %369 = vst.msk [vmem:[#allocation2 + $0x58] sm:$0x1] %vm358, 0.0
        %370 = vst.msk [vmem:[#allocation2 + $0x60] sm:$0xff] %vm356, 0.0
        %371 = vst.msk [vmem:[#allocation2 + $0x68] sm:$0x1] %vm358, 0.0
        %372 = vst.msk [vmem:[#allocation2 + $0x70] sm:$0xff] %vm356, 0.0
        %373 = vst.msk [vmem:[#allocation2 + $0x78] sm:$0x1] %vm358, 0.0
        %v374 = vld [vmem:[%s355] sm:$0xff]
        %s375 = sld [smem:[#allocation3]]
        %v376 = vstv %s375
        %v377 = vmul.f32 %v374, %v376
        %v378 = vadd.f32 %v377, 0.0
        %s379 = scalar_lea.vmem %s355, 8
        %v380 = vld [vmem:[%s379] sm:$0xff]
        %s381 = sld [smem:[#allocation3 + $0x80]]
        %v382 = vstv %s381
        %v383 = vmul.f32 %v380, %v382
        %v384 = vadd.f32 %v378, %v383
        %s385 = scalar_lea.vmem %s355, 16
        %v386 = vld [vmem:[%s385] sm:$0xff]
        %s387 = sld [smem:[#allocation3 + $0x100]]
        %v388 = vstv %s387
        %v389 = vmul.f32 %v386, %v388
        %v390 = vadd.f32 %v384, %v389
        %s391 = scalar_lea.vmem %s355, 24
        %v392 = vld [vmem:[%s391] sm:$0xff]
        %s393 = sld [smem:[#allocation3 + $0x180]]
        %v394 = vstv %s393
        %v395 = vmul.f32 %v392, %v394
        %v396 = vadd.f32 %v390, %v395
        %s397 = sld [smem:[#allocation6]]
        %v398 = vstv %s397
        %v399 = vadd.f32 %v396, %v398
        %v400 = vmax.f32 %v399, 0.0
        %s401 = scalar_lea.vmem [#allocation2], 96
        %vm402 = vcmask 64512
        %403 = vst.msk [vmem:[%s401] sm:$0xff] %vm402, %v400
        %v404 = vld [vmem:[%s355] sm:$0xff]
        %s405 = sld [smem:[#allocation3 + $0x1]]
        %v406 = vstv %s405
        %v407 = vmul.f32 %v404, %v406
        %v408 = vadd.f32 %v407, 0.0
        %v409 = vld [vmem:[%s379] sm:$0xff]
        %s410 = sld [smem:[#allocation3 + $0x81]]
        %v411 = vstv %s410
        %v412 = vmul.f32 %v409, %v411
        %v413 = vadd.f32 %v408, %v412
        %v414 = vld [vmem:[%s385] sm:$0xff]
        %s415 = sld [smem:[#allocation3 + $0x101]]
        %v416 = vstv %s415
        %v417 = vmul.f32 %v414, %v416
        %v418 = vadd.f32 %v413, %v417
        %v419 = vld [vmem:[%s391] sm:$0xff]
        %s420 = sld [smem:[#allocation3 + $0x181]]
        %v421 = vstv %s420
        %v422 = vmul.f32 %v419, %v421
        %v423 = vadd.f32 %v418, %v422
        %s424 = sld [smem:[#allocation6 + $0x1]]
        %v425 = vstv %s424
        %v426 = vadd.f32 %v423, %v425
        %v427 = vmax.f32 %v426, 0.0
        %s428 = scalar_lea.vmem [#allocation2], 112
        %429 = vst.msk [vmem:[%s428] sm:$0xff] %vm402, %v427
        %s430 = scalar_lea.vmem %s355, 32
        %v431 = vld [vmem:[%s430] sm:$0xff]
        %s432 = sld [smem:[#allocation3]]
        %v433 = vstv %s432
        %v434 = vmul.f32 %v431, %v433
        %v435 = vadd.f32 %v434, 0.0
        %s436 = scalar_lea.vmem %s355, 40
        %v437 = vld [vmem:[%s436] sm:$0xff]
        %s438 = sld [smem:[#allocation3 + $0x80]]
        %v439 = vstv %s438
        %v440 = vmul.f32 %v437, %v439
        %v441 = vadd.f32 %v435, %v440
        %s442 = scalar_lea.vmem %s355, 48
        %v443 = vld [vmem:[%s442] sm:$0xff]
        %s444 = sld [smem:[#allocation3 + $0x100]]
        %v445 = vstv %s444
        %v446 = vmul.f32 %v443, %v445
        %v447 = vadd.f32 %v441, %v446
        %s448 = scalar_lea.vmem %s355, 56
        %v449 = vld [vmem:[%s448] sm:$0xff]
        %s450 = sld [smem:[#allocation3 + $0x180]]
        %v451 = vstv %s450
        %v452 = vmul.f32 %v449, %v451
        %v453 = vadd.f32 %v447, %v452
        %s454 = sld [smem:[#allocation6]]
        %v455 = vstv %s454
        %v456 = vadd.f32 %v453, %v455
        %v457 = vmax.f32 %v456, 0.0
        %459 = vrot.lane.b32.xlu0 %v457, 1
        %v460 = vpop.permute.xlu0 %459
        %s462 = scalar_lea.vmem [#allocation2], 64
        %vm463 = vcmask 72712
        %464 = vst.msk [vmem:[%s462] sm:$0xff] %vm463, %v460
        %v465 = vld [vmem:[%s430] sm:$0xff]
        %s466 = sld [smem:[#allocation3 + $0x1]]
        %v467 = vstv %s466
        %v468 = vmul.f32 %v465, %v467
        %v469 = vadd.f32 %v468, 0.0
        %v470 = vld [vmem:[%s436] sm:$0xff]
        %s471 = sld [smem:[#allocation3 + $0x81]]
        %v472 = vstv %s471
        %v473 = vmul.f32 %v470, %v472
        %v474 = vadd.f32 %v469, %v473
        %v475 = vld [vmem:[%s442] sm:$0xff]
        %s476 = sld [smem:[#allocation3 + $0x101]]
        %v477 = vstv %s476
        %v478 = vmul.f32 %v475, %v477
        %v479 = vadd.f32 %v474, %v478
        %v480 = vld [vmem:[%s448] sm:$0xff]
        %s481 = sld [smem:[#allocation3 + $0x181]]
        %v482 = vstv %s481
        %v483 = vmul.f32 %v480, %v482
        %v484 = vadd.f32 %v479, %v483
        %s485 = sld [smem:[#allocation6 + $0x1]]
        %v486 = vstv %s485
        %v487 = vadd.f32 %v484, %v486
        %v488 = vmax.f32 %v487, 0.0
        %490 = vrot.lane.b32.xlu0 %v488, 1
        %v491 = vpop.permute.xlu0 %490
        %s493 = scalar_lea.vmem [#allocation2], 80
        %494 = vst.msk [vmem:[%s493] sm:$0xff] %vm463, %v491
        %s495 = scalar_lea.vmem %s355, 64
        %v496 = vld [vmem:[%s495] sm:$0xff]
        %s497 = sld [smem:[#allocation3]]
        %v498 = vstv %s497
        %v499 = vmul.f32 %v496, %v498
        %v500 = vadd.f32 %v499, 0.0
        %s501 = scalar_lea.vmem %s355, 72
        %v502 = vld [vmem:[%s501] sm:$0xff]
        %s503 = sld [smem:[#allocation3 + $0x80]]
        %v504 = vstv %s503
        %v505 = vmul.f32 %v502, %v504
        %v506 = vadd.f32 %v500, %v505
        %s507 = scalar_lea.vmem %s355, 80
        %v508 = vld [vmem:[%s507] sm:$0xff]
        %s509 = sld [smem:[#allocation3 + $0x100]]
        %v510 = vstv %s509
        %v511 = vmul.f32 %v508, %v510
        %v512 = vadd.f32 %v506, %v511
        %s513 = scalar_lea.vmem %s355, 88
        %v514 = vld [vmem:[%s513] sm:$0xff]
        %s515 = sld [smem:[#allocation3 + $0x180]]
        %v516 = vstv %s515
        %v517 = vmul.f32 %v514, %v516
        %v518 = vadd.f32 %v512, %v517
        %s519 = sld [smem:[#allocation6]]
        %v520 = vstv %s519
        %v521 = vadd.f32 %v518, %v520
        %v522 = vmax.f32 %v521, 0.0
        %s523 = scalar_lea.vmem [#allocation2], 32
        %524 = vst.msk [vmem:[%s523 + $0x1] sm:$0xff] %vm402, %v522
        %v525 = vld [vmem:[%s495] sm:$0xff]
        %s526 = sld [smem:[#allocation3 + $0x1]]
        %v527 = vstv %s526
        %v528 = vmul.f32 %v525, %v527
        %v529 = vadd.f32 %v528, 0.0
        %v530 = vld [vmem:[%s501] sm:$0xff]
        %s531 = sld [smem:[#allocation3 + $0x81]]
        %v532 = vstv %s531
        %v533 = vmul.f32 %v530, %v532
        %v534 = vadd.f32 %v529, %v533
        %v535 = vld [vmem:[%s507] sm:$0xff]
        %s536 = sld [smem:[#allocation3 + $0x101]]
        %v537 = vstv %s536
        %v538 = vmul.f32 %v535, %v537
        %v539 = vadd.f32 %v534, %v538
        %v540 = vld [vmem:[%s513] sm:$0xff]
        %s541 = sld [smem:[#allocation3 + $0x181]]
        %v542 = vstv %s541
        %v543 = vmul.f32 %v540, %v542
        %v544 = vadd.f32 %v539, %v543
        %s545 = sld [smem:[#allocation6 + $0x1]]
        %v546 = vstv %s545
        %v547 = vadd.f32 %v544, %v546
        %v548 = vmax.f32 %v547, 0.0
        %s549 = scalar_lea.vmem [#allocation2], 48
        %550 = vst.msk [vmem:[%s549 + $0x1] sm:$0xff] %vm402, %v548
        %s551 = scalar_lea.vmem %s355, 96
        %v552 = vld [vmem:[%s551] sm:$0xff]
        %s553 = sld [smem:[#allocation3]]
        %v554 = vstv %s553
        %v555 = vmul.f32 %v552, %v554
        %v556 = vadd.f32 %v555, 0.0
        %s557 = scalar_lea.vmem %s355, 104
        %v558 = vld [vmem:[%s557] sm:$0xff]
        %s559 = sld [smem:[#allocation3 + $0x80]]
        %v560 = vstv %s559
        %v561 = vmul.f32 %v558, %v560
        %v562 = vadd.f32 %v556, %v561
        %s563 = scalar_lea.vmem %s355, 112
        %v564 = vld [vmem:[%s563] sm:$0xff]
        %s565 = sld [smem:[#allocation3 + $0x100]]
        %v566 = vstv %s565
        %v567 = vmul.f32 %v564, %v566
        %v568 = vadd.f32 %v562, %v567
        %s569 = scalar_lea.vmem %s355, 120
        %v570 = vld [vmem:[%s569] sm:$0xff]
        %s571 = sld [smem:[#allocation3 + $0x180]]
        %v572 = vstv %s571
        %v573 = vmul.f32 %v570, %v572
        %v574 = vadd.f32 %v568, %v573
        %s575 = sld [smem:[#allocation6]]
        %v576 = vstv %s575
        %v577 = vadd.f32 %v574, %v576
        %v578 = vmax.f32 %v577, 0.0
        %580 = vrot.lane.b32.xlu0 %v578, 1
        %v581 = vpop.permute.xlu0 %580
        %583 = vst.msk [vmem:[#allocation2 + $0x1] sm:$0xff] %vm463, %v581
        %v584 = vld [vmem:[%s551] sm:$0xff]
        %s585 = sld [smem:[#allocation3 + $0x1]]
        %v586 = vstv %s585
        %v587 = vmul.f32 %v584, %v586
        %v588 = vadd.f32 %v587, 0.0
        %v589 = vld [vmem:[%s557] sm:$0xff]
        %s590 = sld [smem:[#allocation3 + $0x81]]
        %v591 = vstv %s590
        %v592 = vmul.f32 %v589, %v591
        %v593 = vadd.f32 %v588, %v592
        %v594 = vld [vmem:[%s563] sm:$0xff]
        %s595 = sld [smem:[#allocation3 + $0x101]]
        %v596 = vstv %s595
        %v597 = vmul.f32 %v594, %v596
        %v598 = vadd.f32 %v593, %v597
        %v599 = vld [vmem:[%s569] sm:$0xff]
        %s600 = sld [smem:[#allocation3 + $0x181]]
        %v601 = vstv %s600
        %v602 = vmul.f32 %v599, %v601
        %v603 = vadd.f32 %v598, %v602
        %s604 = sld [smem:[#allocation6 + $0x1]]
        %v605 = vstv %s604
        %v606 = vadd.f32 %v603, %v605
        %v607 = vmax.f32 %v606, 0.0
        %609 = vrot.lane.b32.xlu0 %v607, 1
        %v610 = vpop.permute.xlu0 %609
        %s612 = scalar_lea.vmem [#allocation2], 16
        %613 = vst.msk [vmem:[%s612 + $0x1] sm:$0xff] %vm463, %v610
        %v614 = vld [vmem:[#allocation2] sm:$0xff]
        %s615 = sld [smem:[#allocation8]]
        %v616 = vstv %s615
        %v617 = vmul.f32 %v614, %v616
        %v618 = vadd.f32 %v617, 0.0
        %v619 = vld [vmem:[%s523] sm:$0xff]
        %s620 = sld [smem:[#allocation8 + $0x80]]
        %v621 = vstv %s620
        %v622 = vmul.f32 %v619, %v621
        %v623 = vadd.f32 %v618, %v622
        %s624 = sld [smem:[#allocation8 + $0x100]]
        %v625 = vstv %s624
        %v626 = vmul.f32 %v614, %v625
        %628 = vrot.lane.b32.xlu0 %v626, 127
        %v629 = vpop.permute.xlu0 %628
        %v631 = vadd.f32 %v623, %v629
        %v632 = vld [vmem:[%s462] sm:$0xff]
        %s633 = sld [smem:[#allocation8 + $0x180]]
        %v634 = vstv %s633
        %v635 = vmul.f32 %v632, %v634
        %v636 = vadd.f32 %v631, %v635
        %v637 = vld [vmem:[%s401] sm:$0xff]
        %s638 = sld [smem:[#allocation8 + $0x200]]
        %v639 = vstv %s638
        %v640 = vmul.f32 %v637, %v639
        %v641 = vadd.f32 %v636, %v640
        %s642 = sld [smem:[#allocation8 + $0x280]]
        %v643 = vstv %s642
        %v644 = vmul.f32 %v632, %v643
        %646 = vrot.lane.b32.xlu0 %v644, 127
        %v647 = vpop.permute.xlu0 %646
        %v649 = vadd.f32 %v641, %v647
        %v650 = vld [vmem:[#allocation2 + $0x1] sm:$0xff]
        %s651 = sld [smem:[#allocation8 + $0x300]]
        %v652 = vstv %s651
        %v653 = vmul.f32 %v650, %v652
        %v654 = vadd.f32 %v649, %v653
        %v655 = vld [vmem:[%s523 + $0x1] sm:$0xff]
        %s656 = sld [smem:[#allocation8 + $0x380]]
        %v657 = vstv %s656
        %v658 = vmul.f32 %v655, %v657
        %v659 = vadd.f32 %v654, %v658
        %s660 = sld [smem:[#allocation8 + $0x400]]
        %v661 = vstv %s660
        %v662 = vmul.f32 %v650, %v661
        %664 = vrot.lane.b32.xlu0 %v662, 127
        %v665 = vpop.permute.xlu0 %664
        %v667 = vadd.f32 %v659, %v665
        %s668 = sld [smem:[#allocation9]]
        %v669 = vstv %s668
        %v670 = vadd.f32 %v667, %v669
        %v671 = vmax.f32 %v670, 0.0
        %v672 = vld [vmem:[%s612] sm:$0xff]
        %s673 = sld [smem:[#allocation8 + $0x1]]
        %v674 = vstv %s673
        %v675 = vmul.f32 %v672, %v674
        %v676 = vadd.f32 %v675, 0.0
        %v677 = vld [vmem:[%s549] sm:$0xff]
        %s678 = sld [smem:[#allocation8 + $0x81]]
        %v679 = vstv %s678
        %v680 = vmul.f32 %v677, %v679
        %v681 = vadd.f32 %v676, %v680
        %s682 = sld [smem:[#allocation8 + $0x101]]
        %v683 = vstv %s682
        %v684 = vmul.f32 %v672, %v683
        %686 = vrot.lane.b32.xlu0 %v684, 127
        %v687 = vpop.permute.xlu0 %686
        %v689 = vadd.f32 %v681, %v687
        %v690 = vld [vmem:[%s493] sm:$0xff]
        %s691 = sld [smem:[#allocation8 + $0x181]]
        %v692 = vstv %s691
        %v693 = vmul.f32 %v690, %v692
        %v694 = vadd.f32 %v689, %v693
        %v695 = vld [vmem:[%s428] sm:$0xff]
        %s696 = sld [smem:[#allocation8 + $0x201]]
        %v697 = vstv %s696
        %v698 = vmul.f32 %v695, %v697
        %v699 = vadd.f32 %v694, %v698
        %s700 = sld [smem:[#allocation8 + $0x281]]
        %v701 = vstv %s700
        %v702 = vmul.f32 %v690, %v701
        %704 = vrot.lane.b32.xlu0 %v702, 127
        %v705 = vpop.permute.xlu0 %704
        %v707 = vadd.f32 %v699, %v705
        %v708 = vld [vmem:[%s612 + $0x1] sm:$0xff]
        %s709 = sld [smem:[#allocation8 + $0x301]]
        %v710 = vstv %s709
        %v711 = vmul.f32 %v708, %v710
        %v712 = vadd.f32 %v707, %v711
        %v713 = vld [vmem:[%s549 + $0x1] sm:$0xff]
        %s714 = sld [smem:[#allocation8 + $0x381]]
        %v715 = vstv %s714
        %v716 = vmul.f32 %v713, %v715
        %v717 = vadd.f32 %v712, %v716
        %s718 = sld [smem:[#allocation8 + $0x401]]
        %v719 = vstv %s718
        %v720 = vmul.f32 %v708, %v719
        %722 = vrot.lane.b32.xlu0 %v720, 127
        %v723 = vpop.permute.xlu0 %722
        %v725 = vadd.f32 %v717, %v723
        %s726 = sld [smem:[#allocation9 + $0x1]]
        %v727 = vstv %s726
        %v728 = vadd.f32 %v725, %v727
        %v729 = vmax.f32 %v728, 0.0
        %s730 = sld [smem:[#allocation11]]
        %v731 = vstv %s730
        %v732 = vmul.f32 %v671, %v731
        %v733 = vadd.f32 %v732, 0.0
        %s734 = sld [smem:[#allocation11 + $0x80]]
        %v735 = vstv %s734
        %v736 = vmul.f32 %v729, %v735
        %v737 = vadd.f32 %v733, %v736
        %s738 = sld [smem:[#allocation12]]
        %v739 = vstv %s738
        %v740 = vadd.f32 %v737, %v739
        %v741 = vmax.f32 %v740, 0.0
        %742 = vst.msk [vmem:[%s350] sm:$0xff] %vm402, %v741
        %s743 = sld [smem:[#allocation11 + $0x1]]
        %v744 = vstv %s743
        %v745 = vmul.f32 %v671, %v744
        %v746 = vadd.f32 %v745, 0.0
        %s747 = sld [smem:[#allocation11 + $0x81]]
        %v748 = vstv %s747
        %v749 = vmul.f32 %v729, %v748
        %v750 = vadd.f32 %v746, %v749
        %s751 = sld [smem:[#allocation12 + $0x1]]
        %v752 = vstv %s751
        %v753 = vadd.f32 %v750, %v752
        %v754 = vmax.f32 %v753, 0.0
        %s755 = scalar_lea.vmem %s350, 8 [#allocation14]
        %756 = vst.msk [vmem:[%s755] sm:$0xff] %vm402, %v754
        %s757 = sld [smem:[#allocation11 + $0x2]]
        %v758 = vstv %s757
        %v759 = vmul.f32 %v671, %v758
        %v760 = vadd.f32 %v759, 0.0
        %s761 = sld [smem:[#allocation11 + $0x82]]
        %v762 = vstv %s761
        %v763 = vmul.f32 %v729, %v762
        %v764 = vadd.f32 %v760, %v763
        %s765 = sld [smem:[#allocation12 + $0x2]]
        %v766 = vstv %s765
        %v767 = vadd.f32 %v764, %v766
        %v768 = vmax.f32 %v767, 0.0
        %s769 = scalar_lea.vmem %s350, 16 [#allocation14]
        %770 = vst.msk [vmem:[%s769] sm:$0xff] %vm402, %v768
        %s771 = sld [smem:[#allocation11 + $0x3]]
        %v772 = vstv %s771
        %v773 = vmul.f32 %v671, %v772
        %v774 = vadd.f32 %v773, 0.0
        %s775 = sld [smem:[#allocation11 + $0x83]]
        %v776 = vstv %s775
        %v777 = vmul.f32 %v729, %v776
        %v778 = vadd.f32 %v774, %v777
        %s779 = sld [smem:[#allocation12 + $0x3]]
        %v780 = vstv %s779
        %v781 = vadd.f32 %v778, %v780
        %v782 = vmax.f32 %v781, 0.0
        %s783 = scalar_lea.vmem %s350, 24 [#allocation14]
        %784 = vst.msk [vmem:[%s783] sm:$0xff] %vm402, %v782
        %s785 = sand.u32 %s185, 1
        %s786 = scalar_lea.sflag [#allocation4], %s785
        %s787 = sand.u32 %s185, 1
        %s788 = smul.addr %s787, 32
        %s789 = scalar_lea.vmem [#allocation14], %s788
        // Predicated region
        $region73: #{res_conv_forward.1} parent=47 // pred_check
          %p790 = pneg %p195
        $region74: #{res_conv_forward.1} parent=47 // pred_check_branch
          %792 = sbr.rel (%p790) target = $region76
        $region75: #{res_conv_forward.1} parent=47 // pred_region
          %s794 = ssub.s32 512, 512
          %795 = vsyncadd %s786, %s794
          %s796 = smul.addr %s25, 4
          %s797 = smul.addr %s796, 128
          %s798 = scalar_lea.hbm %s7, %s797
          %s799 = sshll.u32 %s789, 4
          %s800 = int_to_ptr.vmem [resolvable:$true] %s799
          %805 = dma.vmem_to_hbm [thread:$0]  %s800, 512, %s798, %s786, 128, 128, 8
        $region76: #{res_conv_forward.1} parent=47 // pred_fallthru
          _
      $region48: #{res_conv_forward.1} parent=5 // pred_fallthru
        _
      %p806 = scmp.le.s32.totalorder 2, %s20
      // Predicated region
      $region77: #{res_conv_forward.1} parent=5 // pred_check
        %p807 = pneg %p806
      $region78: #{res_conv_forward.1} parent=5 // pred_check_branch
        %809 = sbr.rel (%p807) target = $region80
      $region79: #{res_conv_forward.1} parent=5 // pred_region
        %s810 = ssub.s32 %s20, 2
        // Predicated region
        $region81: #{res_conv_forward.1} parent=79 // pred_check
          %p811 = pneg %p201
        $region82: #{res_conv_forward.1} parent=79 // pred_check_branch
          %813 = sbr.rel (%p811) target = $region84
        $region83: #{res_conv_forward.1} parent=79 // pred_region
          %s814 = sand.u32 %s186, 1
          %s815 = scalar_lea.sflag [#allocation4], %s814
          %s816 = sand.u32 %s186, 1
          %s817 = smul.addr %s816, 32
          %s818 = scalar_lea.vmem [#allocation14], %s817
          %819 = dma.done %s815, 512
        $region84: #{res_conv_forward.1} parent=79 // pred_fallthru
          _
      $region80: #{res_conv_forward.1} parent=5 // pred_fallthru
        _
    $region6: #{res_conv_forward.1} parent=1 // loop_footer
      %s24 = sadd.s32 1, %s20
    $region7: #{res_conv_forward.1} parent=1 // loop_footer_branch
      %19 = sbr.rel target = $region3
    $region8: #{res_conv_forward.1} parent=1 // loop_exit
      _
    %820 = vsyncpa [#allocation4], 1
    %s821 = scalar_lea.sflag [#allocation4], 1
    %822 = vsyncpa %s821, 1
    %823 = vsyncpa [#allocation5], 1
    %s824 = scalar_lea.sflag [#allocation5], 1
    %825 = vsyncpa %s824, 1
    %826 = vsyncpa [#allocation7], 1
    %827 = vsyncpa [#allocation10], 1
    %828 = vsyncpa [#allocation13], 1

</llo_original>
